<compile_context>
chip_gen: v5e
topology: v5e:2x2
jax: 0.10.0
libtpu: 0.0.40
codegen_flags: <defaults>
</compile_context>

<pallas_src>
import functools
import numpy as np
import jax
import jax.numpy as jnp
from jax import lax
from jax.experimental import pallas as pl
from jax.experimental.pallas import tpu as pltpu

F32 = jnp.float32
BF16 = jnp.bfloat16


# --------------------------------------------------------------------------
# Kernel 1 (grid=(B,), parallel): span max-pool + combine_fc + LSTM input proj
# --------------------------------------------------------------------------
def pre_kernel(seqT_ref, pool_ref, addm_ref,
               ws_ref, wp_ref, bcomb_ref, wih_ref, blstm_ref,
               gates_ref):
    seqT = seqT_ref[0]                                   # (H, S) f32
    addm = addm_ref[...]                                 # (L, S): 0 in-span, -1e30 out
    # Additive mask + max over the LAST (lane) axis: one VPU add, minor reduce.
    masked = seqT[None, :, :] + addm[:, None, :]         # (L, H, S)
    span_max = jnp.max(masked, axis=-1)                  # (L, H)

    pool = pool_ref[0]                                   # (1, H)
    x0 = jnp.dot(span_max.astype(BF16), ws_ref[...], preferred_element_type=F32)
    x0 = x0 + jnp.dot(pool.astype(BF16), wp_ref[...], preferred_element_type=F32)
    x0 = jnp.tanh(x0 + bcomb_ref[...])                   # (L, H) f32

    # Hoisted LSTM input projection (gate order i, f, g, o) + combined biases.
    gates_ref[0] = (jnp.dot(x0.astype(BF16), wih_ref[...], preferred_element_type=F32)
                    + blstm_ref[...])                    # (L, 4H) f32


# --------------------------------------------------------------------------
# Kernel 2 (grid=(1,)): batched LSTM recurrence, (h, c) carried in vregs
# --------------------------------------------------------------------------
def lstm_recurrence_kernel(gates_ref, whh_ref, x_ref, *, hidden, unroll):
    H = hidden
    L = gates_ref.shape[0]
    B = gates_ref.shape[1]
    whh = whh_ref[...]                                   # (H, 4H) f32, kept f32 (latency path)

    def step(t, carry):
        h, c = carry                                     # (B, H) f32 values in vregs
        g = gates_ref[t] + jnp.dot(h, whh, preferred_element_type=F32)   # (B, 4H)
        i_g = jax.nn.sigmoid(g[:, 0:H])
        f_g = jax.nn.sigmoid(g[:, H:2 * H])
        g_g = jnp.tanh(g[:, 2 * H:3 * H])
        o_g = jax.nn.sigmoid(g[:, 3 * H:4 * H])
        c_n = f_g * c + i_g * g_g
        h_n = o_g * jnp.tanh(c_n)
        x_ref[t] = h_n                                   # store this timestep's hidden
        return (h_n, c_n)

    h0 = jnp.zeros((B, H), F32)
    c0 = jnp.zeros((B, H), F32)
    lax.fori_loop(0, L, step, (h0, c0), unroll=unroll)


# --------------------------------------------------------------------------
# Kernel 3 (grid=(B,), parallel): BertAttention + LayerNorm + classify + biaffine
# --------------------------------------------------------------------------
def post_kernel(x_ref, bias_ref,
                wqkv_ref, bqkv_ref, wor_ref, bo_ref, gamma_ref, beta_ref,
                wc_ref, bc_ref, wu_ref, bu_ref, wv_ref, bv_ref,
                wuvu_ref, wuvv_ref, buv_ref, rel_ref,
                sel_ref, cls_ref, *, num_heads, lj_pad):
    x = x_ref[0]                                         # (L, H) f32
    L, H = x.shape
    nh = num_heads
    hd = H // nh
    x_bf = x.astype(BF16)

    # ---- BertSelfAttention: fused QKV projection (one einsum + one bias add) ----
    xb = jnp.broadcast_to(x_bf[None, :, :], (nh, L, H))  # bf16 (halves materialization)
    qkv = jnp.einsum('hlk,hkd->hld', xb, wqkv_ref[...],
                     preferred_element_type=F32) + bqkv_ref[...]        # (nh, L, 3hd)
    q = qkv[:, :, 0:hd].astype(BF16)
    k = qkv[:, :, hd:2 * hd].astype(BF16)
    v = qkv[:, :, 2 * hd:3 * hd].astype(BF16)

    scale = 1.0 / float(np.sqrt(hd))
    s = jnp.einsum('hqd,hkd->hqk', q, k, preferred_element_type=F32) * scale + bias_ref[0]
    # Hand-rolled softmax: divide goes to the EUP via approx reciprocal.
    m = jnp.max(s, axis=-1, keepdims=True)
    e = jnp.exp(s - m)
    p = e * pl.reciprocal(jnp.sum(e, axis=-1, keepdims=True), approx=True)
    ctx = jnp.einsum('hqk,hkd->hqd', p.astype(BF16), v, preferred_element_type=F32)

    # ---- BertSelfOutput: dense (single batched einsum) + residual LayerNorm ----
    attn_ph = jnp.einsum('hld,hdk->hlk', ctx.astype(BF16), wor_ref[...],
                         preferred_element_type=F32)                    # (nh, L, H)
    # Static tree-sum over heads (short dependency chain, guaranteed lowering).
    parts = [attn_ph[i] for i in range(nh)]
    while len(parts) > 1:
        nxt = [parts[j] + parts[j + 1] for j in range(0, len(parts) - 1, 2)]
        if len(parts) % 2:
            nxt.append(parts[-1])
        parts = nxt
    attn = parts[0] + bo_ref[...]

    resid = attn + x
    mean = jnp.mean(resid, axis=-1, keepdims=True)
    var = jnp.mean(jnp.square(resid - mean), axis=-1, keepdims=True)
    y = (resid - mean) * lax.rsqrt(var + 1e-12)
    y = y * gamma_ref[...] + beta_ref[...]               # (L, H) f32

    y_bf = y.astype(BF16)

    # ---- classify_fc (lane-padded weights, full-width unmasked store) ----
    cls_ref[0] = jnp.dot(y_bf, wc_ref[...], preferred_element_type=F32) + bc_ref[...]

    # ---- biaffine selection head ----
    u = jnp.tanh(jnp.dot(y_bf, wu_ref[...], preferred_element_type=F32) + bu_ref[...])
    vv = jnp.tanh(jnp.dot(y_bf, wv_ref[...], preferred_element_type=F32) + bv_ref[...])
    a = jnp.dot(u.astype(BF16), wuvu_ref[...], preferred_element_type=F32)    # (L, H) j-side
    c = jnp.dot(vv.astype(BF16), wuvv_ref[...], preferred_element_type=F32)   # (L, H) i-side
    if lj_pad > L:   # pad the j axis so the selection store is lane-dense
        a = jnp.concatenate([a, jnp.zeros((lj_pad - L, H), F32)], axis=0)     # (Ljp, H)

    buv = buv_ref[...]                                   # (1, H)
    rel = rel_ref[...]                                   # (R, H) bf16
    R = rel.shape[0]

    # Chunk over L_i so the (ic, Ljp, H) uv working set stays bounded for large L.
    IC = 256
    for i0 in range(0, L, IC):
        ic = min(IC, L - i0)
        uv = jnp.tanh(a[None, :, :] + c[i0:i0 + ic, None, :] + buv)           # (ic, Ljp, H)
        # Per-chunk broadcast of the tiny (R, H) table feeds a transpose-free
        # batched MXU contraction that lands directly in (i, r, j) layout.
        rel_b = jnp.broadcast_to(rel[None, :, :], (ic, R, H))
        sel_ref[0, i0:i0 + ic, :, :] = jnp.einsum(
            'irh,ijh->irj', rel_b, uv.astype(BF16), preferred_element_type=F32)


# --------------------------------------------------------------------------
# Glue
# --------------------------------------------------------------------------
def build_span_table(seq_len, window_size):
    """Span membership mask (L, S) following mapping='start' enumeration."""
    spans = []
    for idx in range(seq_len):
        end_idx = min(idx + window_size, seq_len)
        for idxx in range(idx + 1, end_idx + 1):
            spans.append((idx, idxx))
    L = len(spans)
    mat = np.zeros((L, seq_len), np.float32)
    for l, (s0, s1) in enumerate(spans):
        mat[l, s0:s1] = 1.0
    return jnp.asarray(mat)


def _compiler_params(est_bytes, parallel=True):
    # Explicit scoped-VMEM limit: >= platform defaults, <= 48 MiB (safe on v7x).
    limit = int(min(48 * 2 ** 20, max(32 * 2 ** 20, 2 * int(est_bytes))))
    return pltpu.CompilerParams(
        dimension_semantics=("parallel",) if parallel else ("arbitrary",),
        vmem_limit_bytes=limit)


def _nbytes(*arrs):
    return sum(int(np.prod(a.shape)) * a.dtype.itemsize for a in arrs)


def span_selection_forward(params, text_ids, span_mask, *, window_size, num_heads):
    B, S = text_ids.shape
    H = params["emb"].shape[1]
    R = params["rel_emb"].shape[0]
    tag_num = params["classify_w"].shape[0]
    assert H % num_heads == 0
    hd = H // num_heads

    # ---- synthetic encoder (stands in for BertModel) ----
    emb = params["emb"][text_ids]                                        # (B, S, H)
    seq_hiddens = jnp.tanh(emb @ params["enc_w"].T + params["enc_b"])
    pool_hiddens = jnp.tanh(seq_hiddens[:, 0, :] @ params["pool_w"].T
                            + params["pool_b"])[:, None, :]              # (B, 1, H)
    seqT = jnp.transpose(seq_hiddens, (0, 2, 1))                         # (B, H, S)

    mask_mat = build_span_table(S, window_size)                          # (L, S)
    L = mask_mat.shape[0]
    addm = (mask_mat - 1.0) * 1e30                                       # 0 / -1e30

    bias = ((1.0 - span_mask.astype(F32)) * -10000.0)[:, None, :]        # (B, 1, L)

    # ---- wrapper-side weight layout plumbing (one-time, bf16 for MXU operands) ----
    bf = lambda a: a.astype(BF16)
    ws_t = bf(params["combine_w"][:, :H].T)          # span-hidden half of combine_fc
    wp_t = bf(params["combine_w"][:, H:].T)          # pooled-hidden half
    b_comb = params["combine_b"][None, :]
    wih_t = bf(params["lstm_w_ih"].T)                # (H, 4H)
    whh_t = params["lstm_w_hh"].T                    # f32 (recurrence critical path)
    b_lstm = (params["lstm_b_ih"] + params["lstm_b_hh"])[None, :]

    def split_heads_w(w):                            # torch Linear weight (H_out, H_in)
        return w.T.reshape(H, num_heads, hd).transpose(1, 0, 2)   # (nh, H_in, hd)

    def split_heads_b(b):
        return b.reshape(num_heads, 1, hd)

    wqkv = bf(jnp.concatenate([split_heads_w(params["q_w"]),
                               split_heads_w(params["k_w"]),
                               split_heads_w(params["v_w"])], axis=-1))   # (nh, H, 3hd)
    bqkv = jnp.concatenate([split_heads_b(params["q_b"]),
                            split_heads_b(params["k_b"]),
                            split_heads_b(params["v_b"])], axis=-1)       # (nh, 1, 3hd)
    wor = bf(params["o_w"].T.reshape(num_heads, hd, H))                   # (nh, hd, H)
    bo = params["o_b"][None, :]
    gamma = params["ln_g"][None, :]
    beta = params["ln_b"][None, :]

    tag_pad = -(-tag_num // 128) * 128
    wc_pad = bf(jnp.zeros((H, tag_pad), F32).at[:, :tag_num].set(params["classify_w"].T))
    bc_pad = jnp.zeros((1, tag_pad), F32).at[:, :tag_num].set(params["classify_b"][None, :])

    wu_t = bf(params["sel_u_w"].T);  bu = params["sel_u_b"][None, :]
    wv_t = bf(params["sel_v_w"].T);  bvs = params["sel_v_b"][None, :]
    wuvu_t = bf(params["sel_uv_w"][:, :H].T)         # weights hitting u (j-indexed) half
    wuvv_t = bf(params["sel_uv_w"][:, H:].T)         # weights hitting v (i-indexed) half
    buv = params["sel_uv_b"][None, :]
    rel = bf(params["rel_emb"])                      # (R, H)

    lj_pad = -(-L // 128) * 128                      # lane-dense selection output

    cb = lambda b: (b, 0, 0)
    cb4 = lambda b: (b, 0, 0, 0)
    w2 = lambda b: (0, 0)
    w3 = lambda b: (0, 0, 0)

    # ------------------- Stage A: span pool + combine + LSTM input proj -----
    pre_ops = (seqT, pool_hiddens, addm, ws_t, wp_t, b_comb, wih_t, b_lstm)
    gates = pl.pallas_call(
        pre_kernel,
        out_shape=jax.ShapeDtypeStruct((B, L, 4 * H), F32),
        grid=(B,),
        in_specs=[
            pl.BlockSpec((1, H, S), cb),
            pl.BlockSpec((1, 1, H), cb),
            pl.BlockSpec((L, S), w2),
            pl.BlockSpec((H, H), w2),
            pl.BlockSpec((H, H), w2),
            pl.BlockSpec((1, H), w2),
            pl.BlockSpec((H, 4 * H), w2),
            pl.BlockSpec((1, 4 * H), w2),
        ],
        out_specs=pl.BlockSpec((1, L, 4 * H), cb),
        compiler_params=_compiler_params(_nbytes(*pre_ops) + B * L * 4 * H * 4),
    )(*pre_ops)

    # ------------------- Stage B: batched LSTM recurrence -------------------
    gates_t = jnp.transpose(gates, (1, 0, 2))        # (L, B, 4H): time-major, leading-axis indexing
    x_t = pl.pallas_call(
        functools.partial(lstm_recurrence_kernel, hidden=H, unroll=4),
        out_shape=jax.ShapeDtypeStruct((L, B, H), F32),
        grid=(1,),
        in_specs=[pl.BlockSpec((L, B, 4 * H), lambda i: (0, 0, 0)),
                  pl.BlockSpec((H, 4 * H), lambda i: (0, 0))],
        out_specs=pl.BlockSpec((L, B, H), lambda i: (0, 0, 0)),
        compiler_params=_compiler_params(_nbytes(gates_t, whh_t) + L * B * H * 4,
                                         parallel=False),
    )(gates_t, whh_t)
    x = jnp.transpose(x_t, (1, 0, 2))                # (B, L, H)

    # ------------------- Stage C: attention + LN + classify + selection -----
    post_ops = (x, bias, wqkv, bqkv, wor, bo, gamma, beta, wc_pad, bc_pad,
                wu_t, bu, wv_t, bvs, wuvu_t, wuvv_t, buv, rel)
    out_bytes = B * (L * R * lj_pad + L * tag_pad) * 4
    sel_pad, cls_pad = pl.pallas_call(
        functools.partial(post_kernel, num_heads=num_heads, lj_pad=lj_pad),
        out_shape=(jax.ShapeDtypeStruct((B, L, R, lj_pad), F32),
                   jax.ShapeDtypeStruct((B, L, tag_pad), F32)),
        grid=(B,),
        in_specs=[
            pl.BlockSpec((1, L, H), cb),             # x
            pl.BlockSpec((1, 1, L), cb),             # attention mask bias
            pl.BlockSpec((num_heads, H, 3 * hd), w3),
            pl.BlockSpec((num_heads, 1, 3 * hd), w3),
            pl.BlockSpec((num_heads, hd, H), w3),
            pl.BlockSpec((1, H), w2),                # bo
            pl.BlockSpec((1, H), w2),                # gamma
            pl.BlockSpec((1, H), w2),                # beta
            pl.BlockSpec((H, tag_pad), w2),
            pl.BlockSpec((1, tag_pad), w2),
            pl.BlockSpec((H, H), w2),                # wu
            pl.BlockSpec((1, H), w2),                # bu
            pl.BlockSpec((H, H), w2),                # wv
            pl.BlockSpec((1, H), w2),                # bv
            pl.BlockSpec((H, H), w2),                # wuvu
            pl.BlockSpec((H, H), w2),                # wuvv
            pl.BlockSpec((1, H), w2),                # buv
            pl.BlockSpec((R, H), w2),                # rel
        ],
        out_specs=(pl.BlockSpec((1, L, R, lj_pad), cb4),
                   pl.BlockSpec((1, L, tag_pad), cb)),
        compiler_params=_compiler_params(_nbytes(*post_ops) + out_bytes),
    )(*post_ops)

    selection_logits = sel_pad[:, :, :, :L]          # strip L_j lane padding
    classify_logits = cls_pad[:, :, :tag_num]        # strip tag lane padding
    return selection_logits, classify_logits


# --------------------------------------------------------------------------
# Deterministic parameter construction (synthetic; shapes match the module)
# --------------------------------------------------------------------------
def init_params(key, *, vocab, H, tag_num, rel_num):
    keys = jax.random.split(key, 24)

    def w(k, shape, scale=0.05):
        return jax.random.normal(k, shape, F32) * scale

    p = {}
    p["emb"] = w(keys[0], (vocab, H), 0.1)
    p["enc_w"] = w(keys[1], (H, H)); p["enc_b"] = w(keys[2], (H,))
    p["pool_w"] = w(keys[3], (H, H)); p["pool_b"] = w(keys[4], (H,))
    p["combine_w"] = w(keys[5], (H, 2 * H)); p["combine_b"] = w(keys[6], (H,))
    p["lstm_w_ih"] = w(keys[7], (4 * H, H)); p["lstm_w_hh"] = w(keys[8], (4 * H, H))
    p["lstm_b_ih"] = w(keys[9], (4 * H,)); p["lstm_b_hh"] = w(keys[10], (4 * H,))
    p["q_w"] = w(keys[11], (H, H)); p["q_b"] = w(keys[12], (H,))
    p["k_w"] = w(keys[13], (H, H)); p["k_b"] = w(keys[14], (H,))
    p["v_w"] = w(keys[15], (H, H)); p["v_b"] = w(keys[16], (H,))
    p["o_w"] = w(keys[17], (H, H)); p["o_b"] = w(keys[18], (H,))
    p["ln_g"] = jnp.ones((H,), F32); p["ln_b"] = jnp.zeros((H,), F32)
    p["classify_w"] = w(keys[19], (tag_num, H)); p["classify_b"] = jnp.zeros((tag_num,), F32)
    p["rel_emb"] = w(keys[20], (rel_num, H), 0.1)
    p["sel_u_w"] = w(keys[21], (H, H)); p["sel_u_b"] = jnp.zeros((H,), F32)
    p["sel_v_w"] = w(keys[22], (H, H)); p["sel_v_b"] = jnp.zeros((H,), F32)
    p["sel_uv_w"] = w(keys[23], (H, 2 * H)); p["sel_uv_b"] = jnp.zeros((H,), F32)
    return p


if __name__ == "__main__":
    B, S, H = 2, 10, 32
    window_size = 5              # mapping='start' -> L = 40 spans
    num_heads = 4
    tag_num = 2
    rel_num = 4
    vocab = 30

    key = jax.random.PRNGKey(0)
    k_ids, k_mask, k_params = jax.random.split(key, 3)
    text_ids = jax.random.randint(k_ids, (B, S), 1, vocab)
    L = sum(min(window_size, S - i) for i in range(S))
    span_mask = (jax.random.uniform(k_mask, (B, L)) > 0.2).astype(F32)

    params = init_params(k_params, vocab=vocab, H=H, tag_num=tag_num, rel_num=rel_num)

    sel_logits, cls_logits = span_selection_forward(
        params, text_ids, span_mask, window_size=window_size, num_heads=num_heads)
    jax.block_until_ready((sel_logits, cls_logits))

    assert sel_logits.shape == (B, L, rel_num, L), sel_logits.shape
    assert cls_logits.shape == (B, L, tag_num), cls_logits.shape
    assert bool(jnp.all(jnp.isfinite(sel_logits))) and bool(jnp.all(jnp.isfinite(cls_logits)))
    print("KERNEL_OK")
</pallas_src>

<mosaic_0001>
module attributes {stable_mosaic.version = 11 : i64} {
  func.func @pre_kernel(%arg0: i32, %arg1: memref<1x32x10xf32, #tpu.memory_space<vmem>>, %arg2: memref<1x1x32xf32, #tpu.memory_space<vmem>>, %arg3: memref<40x10xf32, #tpu.memory_space<vmem>>, %arg4: memref<32x32xbf16, #tpu.memory_space<vmem>>, %arg5: memref<32x32xbf16, #tpu.memory_space<vmem>>, %arg6: memref<1x32xf32, #tpu.memory_space<vmem>>, %arg7: memref<32x128xbf16, #tpu.memory_space<vmem>>, %arg8: memref<1x128xf32, #tpu.memory_space<vmem>>, %arg9: memref<1x40x128xf32, #tpu.memory_space<vmem>>) attributes {dimension_semantics = [#tpu.dimension_semantics<parallel>], iteration_bounds = array<i64: 2>, scalar_prefetch = 0 : i64, scratch_operands = 0 : i64, tpu.core_type = #tpu.core_type<tc>, window_params = [{transform_indices = @transform_0, window_bounds = array<i64: 1, 32, 10>}, {transform_indices = @transform_1, window_bounds = array<i64: 1, 1, 32>}, {pipeline_mode = #tpu.pipeline_mode<synchronous>, transform_indices = @transform_2, window_bounds = array<i64: 40, 10>}, {pipeline_mode = #tpu.pipeline_mode<synchronous>, transform_indices = @transform_3, window_bounds = array<i64: 32, 32>}, {pipeline_mode = #tpu.pipeline_mode<synchronous>, transform_indices = @transform_4, window_bounds = array<i64: 32, 32>}, {pipeline_mode = #tpu.pipeline_mode<synchronous>, transform_indices = @transform_5, window_bounds = array<i64: 1, 32>}, {pipeline_mode = #tpu.pipeline_mode<synchronous>, transform_indices = @transform_6, window_bounds = array<i64: 32, 128>}, {pipeline_mode = #tpu.pipeline_mode<synchronous>, transform_indices = @transform_7, window_bounds = array<i64: 1, 128>}, {transform_indices = @transform_8, window_bounds = array<i64: 1, 40, 128>}]} {
    %c0 = arith.constant 0 : index
    %c0_0 = arith.constant 0 : index
    %c0_1 = arith.constant 0 : index
    %0 = vector.load %arg1[%c0, %c0_0, %c0_1] : memref<1x32x10xf32, #tpu.memory_space<vmem>>, vector<1x32x10xf32>
    %1 = vector.shape_cast %0 : vector<1x32x10xf32> to vector<32x10xf32>
    %c0_2 = arith.constant 0 : index
    %c0_3 = arith.constant 0 : index
    %2 = vector.load %arg3[%c0_2, %c0_3] : memref<40x10xf32, #tpu.memory_space<vmem>>, vector<40x10xf32>
    %3 = vector.shape_cast %1 : vector<32x10xf32> to vector<1x32x10xf32>
    %4 = vector.shape_cast %2 : vector<40x10xf32> to vector<40x1x10xf32>
    %5 = vector.broadcast %3 : vector<1x32x10xf32> to vector<40x32x10xf32>
    %6 = vector.broadcast %4 : vector<40x1x10xf32> to vector<40x32x10xf32>
    %7 = arith.addf %5, %6 : vector<40x32x10xf32>
    %cst = arith.constant dense<0xFF800000> : vector<40x32xf32>
    %8 = vector.multi_reduction <maximumf>, %7, %cst [2] : vector<40x32x10xf32> to vector<40x32xf32>
    %c0_4 = arith.constant 0 : index
    %c0_5 = arith.constant 0 : index
    %c0_6 = arith.constant 0 : index
    %9 = vector.load %arg2[%c0_4, %c0_5, %c0_6] : memref<1x1x32xf32, #tpu.memory_space<vmem>>, vector<1x1x32xf32>
    %10 = vector.shape_cast %9 : vector<1x1x32xf32> to vector<1x32xf32>
    %11 = arith.truncf %8 : vector<40x32xf32> to vector<40x32xbf16>
    %c0_7 = arith.constant 0 : index
    %c0_8 = arith.constant 0 : index
    %12 = vector.load %arg4[%c0_7, %c0_8] : memref<32x32xbf16, #tpu.memory_space<vmem>>, vector<32x32xbf16>
    %cst_9 = arith.constant dense<0.000000e+00> : vector<40x32xf32>
    %13 = tpu.matmul %11, %12, %cst_9 {dimension_numbers = #tpu.dot_dimension_numbers<[1], [0], [0], [1], [0, 0, 1, 1], [], []>} : vector<40x32xbf16>, vector<32x32xbf16>, vector<40x32xf32> -> vector<40x32xf32>
    %14 = arith.truncf %10 : vector<1x32xf32> to vector<1x32xbf16>
    %c0_10 = arith.constant 0 : index
    %c0_11 = arith.constant 0 : index
    %15 = vector.load %arg5[%c0_10, %c0_11] : memref<32x32xbf16, #tpu.memory_space<vmem>>, vector<32x32xbf16>
    %cst_12 = arith.constant dense<0.000000e+00> : vector<1x32xf32>
    %16 = tpu.matmul %14, %15, %cst_12 {dimension_numbers = #tpu.dot_dimension_numbers<[1], [0], [0], [1], [0, 0, 1, 1], [], []>} : vector<1x32xbf16>, vector<32x32xbf16>, vector<1x32xf32> -> vector<1x32xf32>
    %17 = vector.broadcast %16 : vector<1x32xf32> to vector<40x32xf32>
    %18 = arith.addf %13, %17 : vector<40x32xf32>
    %c0_13 = arith.constant 0 : index
    %c0_14 = arith.constant 0 : index
    %19 = vector.load %arg6[%c0_13, %c0_14] : memref<1x32xf32, #tpu.memory_space<vmem>>, vector<1x32xf32>
    %20 = vector.broadcast %19 : vector<1x32xf32> to vector<40x32xf32>
    %21 = arith.addf %18, %20 : vector<40x32xf32>
    %22 = math.tanh %21 : vector<40x32xf32>
    %23 = arith.truncf %22 : vector<40x32xf32> to vector<40x32xbf16>
    %c0_15 = arith.constant 0 : index
    %c0_16 = arith.constant 0 : index
    %24 = vector.load %arg7[%c0_15, %c0_16] : memref<32x128xbf16, #tpu.memory_space<vmem>>, vector<32x128xbf16>
    %cst_17 = arith.constant dense<0.000000e+00> : vector<40x128xf32>
    %25 = tpu.matmul %23, %24, %cst_17 {dimension_numbers = #tpu.dot_dimension_numbers<[1], [0], [0], [1], [0, 0, 1, 1], [], []>} : vector<40x32xbf16>, vector<32x128xbf16>, vector<40x128xf32> -> vector<40x128xf32>
    %c0_18 = arith.constant 0 : index
    %c0_19 = arith.constant 0 : index
    %26 = vector.load %arg8[%c0_18, %c0_19] : memref<1x128xf32, #tpu.memory_space<vmem>>, vector<1x128xf32>
    %27 = vector.broadcast %26 : vector<1x128xf32> to vector<40x128xf32>
    %28 = arith.addf %25, %27 : vector<40x128xf32>
    %c0_20 = arith.constant 0 : index
    %c0_21 = arith.constant 0 : index
    %c0_22 = arith.constant 0 : index
    %29 = vector.load %arg9[%c0_20, %c0_21, %c0_22] : memref<1x40x128xf32, #tpu.memory_space<vmem>>, vector<1x40x128xf32>
    %30 = vector.shape_cast %29 : vector<1x40x128xf32> to vector<40x128xf32>
    %31 = vector.shape_cast %28 : vector<40x128xf32> to vector<1x40x128xf32>
    tpu.vector_store %arg9[%c0_20, %c0_21, %c0_22], %31 {strides = array<i32>} : memref<1x40x128xf32, #tpu.memory_space<vmem>>, vector<1x40x128xf32>,
    return
  }
  func.func @transform_0(%arg0: i32) -> (i32, i32, i32) {
    %c0_i32 = arith.constant 0 : i32
    %c0_i32_0 = arith.constant 0 : i32
    %c0_i32_1 = arith.constant 0 : i32
    return %arg0, %c0_i32, %c0_i32_0 : i32, i32, i32
  }
  func.func @transform_1(%arg0: i32) -> (i32, i32, i32) {
    %c0_i32 = arith.constant 0 : i32
    %c0_i32_0 = arith.constant 0 : i32
    %c0_i32_1 = arith.constant 0 : i32
    return %arg0, %c0_i32, %c0_i32_0 : i32, i32, i32
  }
  func.func @transform_2(%arg0: i32) -> (i32, i32) {
    %c0_i32 = arith.constant 0 : i32
    %c0_i32_0 = arith.constant 0 : i32
    %c0_i32_1 = arith.constant 0 : i32
    return %c0_i32, %c0_i32_0 : i32, i32
  }
  func.func @transform_3(%arg0: i32) -> (i32, i32) {
    %c0_i32 = arith.constant 0 : i32
    %c0_i32_0 = arith.constant 0 : i32
    %c0_i32_1 = arith.constant 0 : i32
    return %c0_i32, %c0_i32_0 : i32, i32
  }
  func.func @transform_4(%arg0: i32) -> (i32, i32) {
    %c0_i32 = arith.constant 0 : i32
    %c0_i32_0 = arith.constant 0 : i32
    %c0_i32_1 = arith.constant 0 : i32
    return %c0_i32, %c0_i32_0 : i32, i32
  }
  func.func @transform_5(%arg0: i32) -> (i32, i32) {
    %c0_i32 = arith.constant 0 : i32
    %c0_i32_0 = arith.constant 0 : i32
    %c0_i32_1 = arith.constant 0 : i32
    return %c0_i32, %c0_i32_0 : i32, i32
  }
  func.func @transform_6(%arg0: i32) -> (i32, i32) {
    %c0_i32 = arith.constant 0 : i32
    %c0_i32_0 = arith.constant 0 : i32
    %c0_i32_1 = arith.constant 0 : i32
    return %c0_i32, %c0_i32_0 : i32, i32
  }
  func.func @transform_7(%arg0: i32) -> (i32, i32) {
    %c0_i32 = arith.constant 0 : i32
    %c0_i32_0 = arith.constant 0 : i32
    %c0_i32_1 = arith.constant 0 : i32
    return %c0_i32, %c0_i32_0 : i32, i32
  }
  func.func @transform_8(%arg0: i32) -> (i32, i32, i32) {
    %c0_i32 = arith.constant 0 : i32
    %c0_i32_0 = arith.constant 0 : i32
    %c0_i32_1 = arith.constant 0 : i32
    return %arg0, %c0_i32, %c0_i32_0 : i32, i32, i32
  }
}

</mosaic_0001>

<llo_original>
// kernel: tpu_custom_call.1
$region0: #{tpu_custom_call.1}
  #allocation0 [shape = 'u32[]', space=smem, size = 0x4, offset = 0x4, fixed_abs, tag = 'smem constant byte address 0x4 - core index']
  #allocation1 [shape = 'u32[72,128]{1,0:T(1,128)}', space=vmem, size = 0x9000, scoped, tag = 'internal scratch']
  %s0 = inlined_call_operand.vmem [shape: f32[2,32,10], index: 0, kind: input, shape index: {}]
  %s1 = inlined_call_operand.vmem [shape: f32[2,1,32], index: 1, kind: input, shape index: {}]
  %s2 = inlined_call_operand.vmem [shape: f32[40,10], index: 2, kind: input, shape index: {}]
  %s3 = inlined_call_operand.vmem [shape: bf16[32,32], index: 3, kind: input, shape index: {}]
  %s4 = inlined_call_operand.vmem [shape: bf16[32,32], index: 4, kind: input, shape index: {}]
  %s5 = inlined_call_operand.vmem [shape: f32[1,32], index: 5, kind: input, shape index: {}]
  %s6 = inlined_call_operand.vmem [shape: bf16[32,128], index: 6, kind: input, shape index: {}]
  %s7 = inlined_call_operand.vmem [shape: f32[1,128], index: 7, kind: input, shape index: {}]
  %s8 = inlined_call_operand.hbm [shape: f32[2,40,128], index: 8, kind: output, shape index: {}]
  %s9 = sld [smem:[#allocation0]]
  $region65: #{tpu_custom_call.1} parent=0
    _
  %s11 = ssub.s32 1, %s9
  %s12 = scalar_select 0, %s11, %s9
  $region1: #{tpu_custom_call.1} parent=0
    #allocation2 [shape = 'u8[40960]{0}', space=vmem, size = 0xa000, scoped, tag = 'output window, operand 0']
    #allocation3 [shape = 's32[2]{0}', space=sflag, size = 0x8, scoped, tag = 'scoped memory for tpu_custom_call.1']
    %13 = vsyncpa [#allocation3], 0
    %s14 = scalar_lea.sflag [#allocation3], 1
    %15 = vsyncpa %s14, 0
    loop: start=0, step=1, limit=4
    $region2: #{tpu_custom_call.1} parent=1 // loop_pre_header
      _
    $region3: #{tpu_custom_call.1} parent=1 // loop_header
      %s17 = sphi 0, %s21
      %p18 = scmp.ge.s32.totalorder %s17, 4
      %s27 = sphi 0, %s29
      %s30 = sphi 0, %s27
      %s31 = sphi 0, %s30
      %s47 = sphi 0, %s31
      %s53 = sphi 0, %s55
      %s56 = sphi 0, %s53
      %s57 = sphi 0, %s56
      %s73 = sphi 0, %s57
      %s77 = sphi 0, %s77
      %s79 = sphi 0, %s77
      %s80 = sphi 0, %s79
      %s94 = sphi 0, %s80
      %s98 = sphi 0, %s98
      %s100 = sphi 0, %s98
      %s101 = sphi 0, %s100
      %s115 = sphi 0, %s101
      %s119 = sphi 0, %s119
      %s121 = sphi 0, %s119
      %s122 = sphi 0, %s121
      %s136 = sphi 0, %s122
      %s140 = sphi 0, %s140
      %s142 = sphi 0, %s140
      %s143 = sphi 0, %s142
      %s157 = sphi 0, %s143
      %s161 = sphi 0, %s161
      %s163 = sphi 0, %s161
      %s164 = sphi 0, %s163
      %s178 = sphi 0, %s164
      %s182 = sphi 0, %s182
      %s184 = sphi 0, %s182
      %s185 = sphi 0, %s184
      %s199 = sphi 0, %s185
      %s205 = sphi 0, %s207
      %s208 = sphi 0, %s205
      %s209 = sphi 0, %s208
      %s225 = sphi 0, %s209
    $region4: #{tpu_custom_call.1} parent=1 // loop_header_branch
      %20 = sbr.rel (%p18) target = $region8
    $region5: #{tpu_custom_call.1} parent=1 // loop_body
      %s22 = ssub.s32 %s17, 1
      %s23 = ssub.s32 %s17, 2
      %s24 = sadd.s32 %s17, 1
      %s25 = ssub.s32 %s17, %s24
      %p26 = scmp.eq.s32.totalorder %s25, 0
      %s28 = sadd.s32 %s27, 1
      %s29 = scalar_select %p26, %s27, %s28
      %p32 = pneg %p26
      %p33 = scmp.eq.s32.totalorder %s17, 1
      %p34 = por %p32, %p33
      %p35 = scmp.ne.s32.totalorder %s27, %s30
      %p36 = scmp.eq.s32.totalorder %s17, 0
      %p37 = por %p35, %p36
      %p38 = scmp.ne.s32.totalorder %s27, %s30
      %p39 = scmp.eq.s32.totalorder %s22, 1
      %p40 = por %p38, %p39
      %p41 = scmp.ne.s32.totalorder %s30, %s31
      %p42 = scmp.eq.s32.totalorder %s22, 0
      %p43 = por %p41, %p42
      %p44 = scmp.ne.s32.totalorder %s30, %s31
      %p45 = scmp.eq.s32.totalorder %s23, 1
      %p46 = por %p44, %p45
      %p48 = scmp.ne.s32.totalorder %s31, %s47
      %p49 = scmp.eq.s32.totalorder %s23, 0
      %p50 = por %p48, %p49
      %s51 = ssub.s32 %s17, %s24
      %p52 = scmp.eq.s32.totalorder %s51, 0
      %s54 = sadd.s32 %s53, 1
      %s55 = scalar_select %p52, %s53, %s54
      %p58 = pneg %p52
      %p59 = scmp.eq.s32.totalorder %s17, 1
      %p60 = por %p58, %p59
      %p61 = scmp.ne.s32.totalorder %s53, %s56
      %p62 = scmp.eq.s32.totalorder %s17, 0
      %p63 = por %p61, %p62
      %p64 = scmp.ne.s32.totalorder %s53, %s56
      %p65 = scmp.eq.s32.totalorder %s22, 1
      %p66 = por %p64, %p65
      %p67 = scmp.ne.s32.totalorder %s56, %s57
      %p68 = scmp.eq.s32.totalorder %s22, 0
      %p69 = por %p67, %p68
      %p70 = scmp.ne.s32.totalorder %s56, %s57
      %p71 = scmp.eq.s32.totalorder %s23, 1
      %p72 = por %p70, %p71
      %p74 = scmp.ne.s32.totalorder %s57, %s73
      %p75 = scmp.eq.s32.totalorder %s23, 0
      %p76 = por %p74, %p75
      %s78 = sadd.s32 %s77, 1
      %p81 = scmp.eq.s32.totalorder %s17, 1
      %p82 = scmp.ne.s32.totalorder %s77, %s79
      %p83 = scmp.eq.s32.totalorder %s17, 0
      %p84 = por %p82, %p83
      %p85 = scmp.ne.s32.totalorder %s77, %s79
      %p86 = scmp.eq.s32.totalorder %s22, 1
      %p87 = por %p85, %p86
      %p88 = scmp.ne.s32.totalorder %s79, %s80
      %p89 = scmp.eq.s32.totalorder %s22, 0
      %p90 = por %p88, %p89
      %p91 = scmp.ne.s32.totalorder %s79, %s80
      %p92 = scmp.eq.s32.totalorder %s23, 1
      %p93 = por %p91, %p92
      %p95 = scmp.ne.s32.totalorder %s80, %s94
      %p96 = scmp.eq.s32.totalorder %s23, 0
      %p97 = por %p95, %p96
      %s99 = sadd.s32 %s98, 1
      %p102 = scmp.eq.s32.totalorder %s17, 1
      %p103 = scmp.ne.s32.totalorder %s98, %s100
      %p104 = scmp.eq.s32.totalorder %s17, 0
      %p105 = por %p103, %p104
      %p106 = scmp.ne.s32.totalorder %s98, %s100
      %p107 = scmp.eq.s32.totalorder %s22, 1
      %p108 = por %p106, %p107
      %p109 = scmp.ne.s32.totalorder %s100, %s101
      %p110 = scmp.eq.s32.totalorder %s22, 0
      %p111 = por %p109, %p110
      %p112 = scmp.ne.s32.totalorder %s100, %s101
      %p113 = scmp.eq.s32.totalorder %s23, 1
      %p114 = por %p112, %p113
      %p116 = scmp.ne.s32.totalorder %s101, %s115
      %p117 = scmp.eq.s32.totalorder %s23, 0
      %p118 = por %p116, %p117
      %s120 = sadd.s32 %s119, 1
      %p123 = scmp.eq.s32.totalorder %s17, 1
      %p124 = scmp.ne.s32.totalorder %s119, %s121
      %p125 = scmp.eq.s32.totalorder %s17, 0
      %p126 = por %p124, %p125
      %p127 = scmp.ne.s32.totalorder %s119, %s121
      %p128 = scmp.eq.s32.totalorder %s22, 1
      %p129 = por %p127, %p128
      %p130 = scmp.ne.s32.totalorder %s121, %s122
      %p131 = scmp.eq.s32.totalorder %s22, 0
      %p132 = por %p130, %p131
      %p133 = scmp.ne.s32.totalorder %s121, %s122
      %p134 = scmp.eq.s32.totalorder %s23, 1
      %p135 = por %p133, %p134
      %p137 = scmp.ne.s32.totalorder %s122, %s136
      %p138 = scmp.eq.s32.totalorder %s23, 0
      %p139 = por %p137, %p138
      %s141 = sadd.s32 %s140, 1
      %p144 = scmp.eq.s32.totalorder %s17, 1
      %p145 = scmp.ne.s32.totalorder %s140, %s142
      %p146 = scmp.eq.s32.totalorder %s17, 0
      %p147 = por %p145, %p146
      %p148 = scmp.ne.s32.totalorder %s140, %s142
      %p149 = scmp.eq.s32.totalorder %s22, 1
      %p150 = por %p148, %p149
      %p151 = scmp.ne.s32.totalorder %s142, %s143
      %p152 = scmp.eq.s32.totalorder %s22, 0
      %p153 = por %p151, %p152
      %p154 = scmp.ne.s32.totalorder %s142, %s143
      %p155 = scmp.eq.s32.totalorder %s23, 1
      %p156 = por %p154, %p155
      %p158 = scmp.ne.s32.totalorder %s143, %s157
      %p159 = scmp.eq.s32.totalorder %s23, 0
      %p160 = por %p158, %p159
      %s162 = sadd.s32 %s161, 1
      %p165 = scmp.eq.s32.totalorder %s17, 1
      %p166 = scmp.ne.s32.totalorder %s161, %s163
      %p167 = scmp.eq.s32.totalorder %s17, 0
      %p168 = por %p166, %p167
      %p169 = scmp.ne.s32.totalorder %s161, %s163
      %p170 = scmp.eq.s32.totalorder %s22, 1
      %p171 = por %p169, %p170
      %p172 = scmp.ne.s32.totalorder %s163, %s164
      %p173 = scmp.eq.s32.totalorder %s22, 0
      %p174 = por %p172, %p173
      %p175 = scmp.ne.s32.totalorder %s163, %s164
      %p176 = scmp.eq.s32.totalorder %s23, 1
      %p177 = por %p175, %p176
      %p179 = scmp.ne.s32.totalorder %s164, %s178
      %p180 = scmp.eq.s32.totalorder %s23, 0
      %p181 = por %p179, %p180
      %s183 = sadd.s32 %s182, 1
      %p186 = scmp.eq.s32.totalorder %s17, 1
      %p187 = scmp.ne.s32.totalorder %s182, %s184
      %p188 = scmp.eq.s32.totalorder %s17, 0
      %p189 = por %p187, %p188
      %p190 = scmp.ne.s32.totalorder %s182, %s184
      %p191 = scmp.eq.s32.totalorder %s22, 1
      %p192 = por %p190, %p191
      %p193 = scmp.ne.s32.totalorder %s184, %s185
      %p194 = scmp.eq.s32.totalorder %s22, 0
      %p195 = por %p193, %p194
      %p196 = scmp.ne.s32.totalorder %s184, %s185
      %p197 = scmp.eq.s32.totalorder %s23, 1
      %p198 = por %p196, %p197
      %p200 = scmp.ne.s32.totalorder %s185, %s199
      %p201 = scmp.eq.s32.totalorder %s23, 0
      %p202 = por %p200, %p201
      %s203 = ssub.s32 %s17, %s24
      %p204 = scmp.eq.s32.totalorder %s203, 0
      %s206 = sadd.s32 %s205, 1
      %s207 = scalar_select %p204, %s205, %s206
      %p210 = pneg %p204
      %p211 = scmp.eq.s32.totalorder %s17, 1
      %p212 = por %p210, %p211
      %p213 = scmp.ne.s32.totalorder %s205, %s208
      %p214 = scmp.eq.s32.totalorder %s17, 0
      %p215 = por %p213, %p214
      %p216 = scmp.ne.s32.totalorder %s205, %s208
      %p217 = scmp.eq.s32.totalorder %s22, 1
      %p218 = por %p216, %p217
      %p219 = scmp.ne.s32.totalorder %s208, %s209
      %p220 = scmp.eq.s32.totalorder %s22, 0
      %p221 = por %p219, %p220
      %p222 = scmp.ne.s32.totalorder %s208, %s209
      %p223 = scmp.eq.s32.totalorder %s23, 1
      %p224 = por %p222, %p223
      %p226 = scmp.ne.s32.totalorder %s209, %s225
      %p227 = scmp.eq.s32.totalorder %s23, 0
      %p228 = por %p226, %p227
      %p229 = scmp.le.s32.totalorder 1, %s17
      %p230 = scmp.lt.s32.totalorder %s17, 3
      %p231 = pnand %p229, %p230
      %p232 = pneg %p231
      // Predicated region
      $region9: #{tpu_custom_call.1} parent=5 // pred_check
        _
      $region10: #{tpu_custom_call.1} parent=5 // pred_check_branch
        %234 = sbr.rel (%p231) target = $region12
      $region11: #{tpu_custom_call.1} parent=5 // pred_region
        %s235 = ssub.s32 %s17, 1
        // Predicated region
        $region13: #{tpu_custom_call.1} parent=11 // pred_check
          %p236 = pneg %p90
        $region14: #{tpu_custom_call.1} parent=11 // pred_check_branch
          %238 = sbr.rel (%p236) target = $region16
        $region15: #{tpu_custom_call.1} parent=11 // pred_region
          _
        $region16: #{tpu_custom_call.1} parent=11 // pred_fallthru
          _
        // Predicated region
        $region17: #{tpu_custom_call.1} parent=11 // pred_check
          %p239 = pneg %p111
        $region18: #{tpu_custom_call.1} parent=11 // pred_check_branch
          %241 = sbr.rel (%p239) target = $region20
        $region19: #{tpu_custom_call.1} parent=11 // pred_region
          _
        $region20: #{tpu_custom_call.1} parent=11 // pred_fallthru
          _
        // Predicated region
        $region21: #{tpu_custom_call.1} parent=11 // pred_check
          %p242 = pneg %p132
        $region22: #{tpu_custom_call.1} parent=11 // pred_check_branch
          %244 = sbr.rel (%p242) target = $region24
        $region23: #{tpu_custom_call.1} parent=11 // pred_region
          _
        $region24: #{tpu_custom_call.1} parent=11 // pred_fallthru
          _
        // Predicated region
        $region25: #{tpu_custom_call.1} parent=11 // pred_check
          %p245 = pneg %p153
        $region26: #{tpu_custom_call.1} parent=11 // pred_check_branch
          %247 = sbr.rel (%p245) target = $region28
        $region27: #{tpu_custom_call.1} parent=11 // pred_region
          _
        $region28: #{tpu_custom_call.1} parent=11 // pred_fallthru
          _
        // Predicated region
        $region29: #{tpu_custom_call.1} parent=11 // pred_check
          %p248 = pneg %p174
        $region30: #{tpu_custom_call.1} parent=11 // pred_check_branch
          %250 = sbr.rel (%p248) target = $region32
        $region31: #{tpu_custom_call.1} parent=11 // pred_region
          _
        $region32: #{tpu_custom_call.1} parent=11 // pred_fallthru
          _
        // Predicated region
        $region33: #{tpu_custom_call.1} parent=11 // pred_check
          %p251 = pneg %p195
        $region34: #{tpu_custom_call.1} parent=11 // pred_check_branch
          %253 = sbr.rel (%p251) target = $region36
        $region35: #{tpu_custom_call.1} parent=11 // pred_region
          _
        $region36: #{tpu_custom_call.1} parent=11 // pred_fallthru
          _
      $region12: #{tpu_custom_call.1} parent=5 // pred_fallthru
        _
      %p254 = scmp.lt.s32.totalorder %s17, 2
      // Predicated region
      $region37: #{tpu_custom_call.1} parent=5 // pred_check
        %p255 = pneg %p254
      $region38: #{tpu_custom_call.1} parent=5 // pred_check_branch
        %257 = sbr.rel (%p255) target = $region40
      $region39: #{tpu_custom_call.1} parent=5 // pred_region
        // Predicated region
        $region41: #{tpu_custom_call.1} parent=39 // pred_check
          %p258 = pneg %p37
        $region42: #{tpu_custom_call.1} parent=39 // pred_check_branch
          %260 = sbr.rel (%p258) target = $region44
        $region43: #{tpu_custom_call.1} parent=39 // pred_region
          %p261 = scmp.lt.s32.totalorder %s17, 1
          %s262 = scalar_select %p261, %s17, 1
          %s263 = smul.addr %s262, 4
          %s264 = smul.addr %s263, 8
          %s265 = scalar_lea.vmem %s0, %s264
        $region44: #{tpu_custom_call.1} parent=39 // pred_fallthru
          _
        // Predicated region
        $region45: #{tpu_custom_call.1} parent=39 // pred_check
          %p266 = pneg %p63
        $region46: #{tpu_custom_call.1} parent=39 // pred_check_branch
          %268 = sbr.rel (%p266) target = $region48
        $region47: #{tpu_custom_call.1} parent=39 // pred_region
          %p269 = scmp.lt.s32.totalorder %s17, 1
          %s270 = scalar_select %p269, %s17, 1
          %s271 = scalar_lea.vmem %s1, %s270
        $region48: #{tpu_custom_call.1} parent=39 // pred_fallthru
          _
      $region40: #{tpu_custom_call.1} parent=5 // pred_fallthru
        _
      %p272 = scmp.le.s32.totalorder 1, %s17
      %p273 = scmp.lt.s32.totalorder %s17, 3
      %p274 = pnand %p272, %p273
      %p275 = pneg %p274
      // Predicated region
      $region49: #{tpu_custom_call.1} parent=5 // pred_check
        _
      $region50: #{tpu_custom_call.1} parent=5 // pred_check_branch
        %277 = sbr.rel (%p274) target = $region52
      $region51: #{tpu_custom_call.1} parent=5 // pred_region
        %s278 = ssub.s32 %s17, 1
        %p279 = scmp.lt.s32.totalorder %s22, 1
        %s280 = scalar_select %p279, %s22, 1
        %s281 = smul.addr %s280, 4
        %s282 = smul.addr %s281, 8
        %s283 = scalar_lea.vmem %s0, %s282
        %p284 = pneg %p43
        %p285 = pneg %p40
        %p286 = scmp.lt.s32.totalorder %s22, 1
        %s287 = scalar_select %p286, %s22, 1
        %s288 = scalar_lea.vmem %s1, %s287
        %p289 = pneg %p69
        %p290 = pneg %p66
        %p291 = pneg %p90
        %p292 = pneg %p87
        %p293 = pneg %p111
        %p294 = pneg %p108
        %p295 = pneg %p132
        %p296 = pneg %p129
        %p297 = pneg %p153
        %p298 = pneg %p150
        %p299 = pneg %p174
        %p300 = pneg %p171
        %p301 = pneg %p195
        %p302 = pneg %p192
        %p303 = pneg %p221
        %p304 = pneg %p218
        %s305 = sand.u32 %s208, 1
        %s306 = scalar_lea.sflag [#allocation3], %s305
        %s307 = sand.u32 %s208, 1
        %s308 = smul.addr %s307, 40
        %s309 = scalar_lea.vmem [#allocation2], %s308
        %p310 = scmp.lt.s32.totalorder %s22, 1
        %s311 = scalar_select %p310, %s22, 1
        %s312 = smul.addr %s311, 4
        %s313 = smul.addr %s312, 8
        %s314 = scalar_lea.vmem %s0, %s313
        %p315 = scmp.lt.s32.totalorder %s22, 1
        %s316 = scalar_select %p315, %s22, 1
        %s317 = scalar_lea.vmem %s1, %s316
        %v319 = vld [vmem:[%s314] sm:$0xff]
        %v320 = vld [vmem:[%s314 + $0x8] sm:$0xff]
        %v321 = vld [vmem:[%s314 + $0x10] sm:$0xff]
        %v322 = vld [vmem:[%s314 + $0x18] sm:$0xff]
        %v323 = vld [vmem:[%s2] sm:$0xff]
        %v324 = vld [vmem:[%s2 + $0x8] sm:$0xff]
        %v325 = vld [vmem:[%s2 + $0x10] sm:$0xff]
        %v326 = vld [vmem:[%s2 + $0x18] sm:$0xff]
        %v327 = vld [vmem:[%s2 + $0x20] sm:$0xff]
        %v333 = vrot.slane %v323, 1
        %v334 = vrot.slane %v323, 2
        %v335 = vrot.slane %v323, 3
        %v336 = vrot.slane %v323, 4
        %v337 = vrot.slane %v323, 5
        %v338 = vrot.slane %v323, 6
        %v339 = vrot.slane %v323, 7
        %v340 = vrot.slane %v324, 1
        %v341 = vrot.slane %v324, 2
        %v342 = vrot.slane %v324, 3
        %v343 = vrot.slane %v324, 4
        %v344 = vrot.slane %v324, 5
        %v345 = vrot.slane %v324, 6
        %v346 = vrot.slane %v324, 7
        %v347 = vrot.slane %v325, 1
        %v348 = vrot.slane %v325, 2
        %v349 = vrot.slane %v325, 3
        %v350 = vrot.slane %v325, 4
        %v351 = vrot.slane %v325, 5
        %v352 = vrot.slane %v325, 6
        %v353 = vrot.slane %v325, 7
        %v354 = vrot.slane %v326, 1
        %v355 = vrot.slane %v326, 2
        %v356 = vrot.slane %v326, 3
        %v357 = vrot.slane %v326, 4
        %v358 = vrot.slane %v326, 5
        %v359 = vrot.slane %v326, 6
        %v360 = vrot.slane %v326, 7
        %v361 = vrot.slane %v327, 1
        %v362 = vrot.slane %v327, 2
        %v363 = vrot.slane %v327, 3
        %v364 = vrot.slane %v327, 4
        %v365 = vrot.slane %v327, 5
        %v366 = vrot.slane %v327, 6
        %v367 = vrot.slane %v327, 7
        %v368 = vperm.slane %v323, 0
        %v369 = vperm.slane %v333, 0
        %v370 = vperm.slane %v334, 0
        %v371 = vperm.slane %v335, 0
        %v372 = vperm.slane %v336, 0
        %v373 = vperm.slane %v337, 0
        %v374 = vperm.slane %v338, 0
        %v375 = vperm.slane %v339, 0
        %v376 = vperm.slane %v324, 0
        %v377 = vperm.slane %v340, 0
        %v378 = vperm.slane %v341, 0
        %v379 = vperm.slane %v342, 0
        %v380 = vperm.slane %v343, 0
        %v381 = vperm.slane %v344, 0
        %v382 = vperm.slane %v345, 0
        %v383 = vperm.slane %v346, 0
        %v384 = vperm.slane %v325, 0
        %v385 = vperm.slane %v347, 0
        %v386 = vperm.slane %v348, 0
        %v387 = vperm.slane %v349, 0
        %v388 = vperm.slane %v350, 0
        %v389 = vperm.slane %v351, 0
        %v390 = vperm.slane %v352, 0
        %v391 = vperm.slane %v353, 0
        %v392 = vperm.slane %v326, 0
        %v393 = vperm.slane %v354, 0
        %v394 = vperm.slane %v355, 0
        %v395 = vperm.slane %v356, 0
        %v396 = vperm.slane %v357, 0
        %v397 = vperm.slane %v358, 0
        %v398 = vperm.slane %v359, 0
        %v399 = vperm.slane %v360, 0
        %v400 = vperm.slane %v327, 0
        %v401 = vperm.slane %v361, 0
        %v402 = vperm.slane %v362, 0
        %v403 = vperm.slane %v363, 0
        %v404 = vperm.slane %v364, 0
        %v405 = vperm.slane %v365, 0
        %v406 = vperm.slane %v366, 0
        %v407 = vperm.slane %v367, 0
        %v448 = vadd.f32 %v319, %v368
        %v449 = vadd.f32 %v320, %v368
        %v450 = vadd.f32 %v321, %v368
        %v451 = vadd.f32 %v322, %v368
        %v452 = vadd.f32 %v319, %v369
        %v453 = vadd.f32 %v320, %v369
        %v454 = vadd.f32 %v321, %v369
        %v455 = vadd.f32 %v322, %v369
        %v456 = vadd.f32 %v319, %v370
        %v457 = vadd.f32 %v320, %v370
        %v458 = vadd.f32 %v321, %v370
        %v459 = vadd.f32 %v322, %v370
        %v460 = vadd.f32 %v319, %v371
        %v461 = vadd.f32 %v320, %v371
        %v462 = vadd.f32 %v321, %v371
        %v463 = vadd.f32 %v322, %v371
        %v464 = vadd.f32 %v319, %v372
        %v465 = vadd.f32 %v320, %v372
        %v466 = vadd.f32 %v321, %v372
        %v467 = vadd.f32 %v322, %v372
        %v468 = vadd.f32 %v319, %v373
        %v469 = vadd.f32 %v320, %v373
        %v470 = vadd.f32 %v321, %v373
        %v471 = vadd.f32 %v322, %v373
        %v472 = vadd.f32 %v319, %v374
        %v473 = vadd.f32 %v320, %v374
        %v474 = vadd.f32 %v321, %v374
        %v475 = vadd.f32 %v322, %v374
        %v476 = vadd.f32 %v319, %v375
        %v477 = vadd.f32 %v320, %v375
        %v478 = vadd.f32 %v321, %v375
        %v479 = vadd.f32 %v322, %v375
        %v480 = vadd.f32 %v319, %v376
        %v481 = vadd.f32 %v320, %v376
        %v482 = vadd.f32 %v321, %v376
        %v483 = vadd.f32 %v322, %v376
        %v484 = vadd.f32 %v319, %v377
        %v485 = vadd.f32 %v320, %v377
        %v486 = vadd.f32 %v321, %v377
        %v487 = vadd.f32 %v322, %v377
        %v488 = vadd.f32 %v319, %v378
        %v489 = vadd.f32 %v320, %v378
        %v490 = vadd.f32 %v321, %v378
        %v491 = vadd.f32 %v322, %v378
        %v492 = vadd.f32 %v319, %v379
        %v493 = vadd.f32 %v320, %v379
        %v494 = vadd.f32 %v321, %v379
        %v495 = vadd.f32 %v322, %v379
        %v496 = vadd.f32 %v319, %v380
        %v497 = vadd.f32 %v320, %v380
        %v498 = vadd.f32 %v321, %v380
        %v499 = vadd.f32 %v322, %v380
        %v500 = vadd.f32 %v319, %v381
        %v501 = vadd.f32 %v320, %v381
        %v502 = vadd.f32 %v321, %v381
        %v503 = vadd.f32 %v322, %v381
        %v504 = vadd.f32 %v319, %v382
        %v505 = vadd.f32 %v320, %v382
        %v506 = vadd.f32 %v321, %v382
        %v507 = vadd.f32 %v322, %v382
        %v508 = vadd.f32 %v319, %v383
        %v509 = vadd.f32 %v320, %v383
        %v510 = vadd.f32 %v321, %v383
        %v511 = vadd.f32 %v322, %v383
        %v512 = vadd.f32 %v319, %v384
        %v513 = vadd.f32 %v320, %v384
        %v514 = vadd.f32 %v321, %v384
        %v515 = vadd.f32 %v322, %v384
        %v516 = vadd.f32 %v319, %v385
        %v517 = vadd.f32 %v320, %v385
        %v518 = vadd.f32 %v321, %v385
        %v519 = vadd.f32 %v322, %v385
        %v520 = vadd.f32 %v319, %v386
        %v521 = vadd.f32 %v320, %v386
        %v522 = vadd.f32 %v321, %v386
        %v523 = vadd.f32 %v322, %v386
        %v524 = vadd.f32 %v319, %v387
        %v525 = vadd.f32 %v320, %v387
        %v526 = vadd.f32 %v321, %v387
        %v527 = vadd.f32 %v322, %v387
        %v528 = vadd.f32 %v319, %v388
        %v529 = vadd.f32 %v320, %v388
        %v530 = vadd.f32 %v321, %v388
        %v531 = vadd.f32 %v322, %v388
        %v532 = vadd.f32 %v319, %v389
        %v533 = vadd.f32 %v320, %v389
        %v534 = vadd.f32 %v321, %v389
        %v535 = vadd.f32 %v322, %v389
        %v536 = vadd.f32 %v319, %v390
        %v537 = vadd.f32 %v320, %v390
        %v538 = vadd.f32 %v321, %v390
        %v539 = vadd.f32 %v322, %v390
        %v540 = vadd.f32 %v319, %v391
        %v541 = vadd.f32 %v320, %v391
        %v542 = vadd.f32 %v321, %v391
        %v543 = vadd.f32 %v322, %v391
        %v544 = vadd.f32 %v319, %v392
        %v545 = vadd.f32 %v320, %v392
        %v546 = vadd.f32 %v321, %v392
        %v547 = vadd.f32 %v322, %v392
        %v548 = vadd.f32 %v319, %v393
        %v549 = vadd.f32 %v320, %v393
        %v550 = vadd.f32 %v321, %v393
        %v551 = vadd.f32 %v322, %v393
        %v552 = vadd.f32 %v319, %v394
        %v553 = vadd.f32 %v320, %v394
        %v554 = vadd.f32 %v321, %v394
        %v555 = vadd.f32 %v322, %v394
        %v556 = vadd.f32 %v319, %v395
        %v557 = vadd.f32 %v320, %v395
        %v558 = vadd.f32 %v321, %v395
        %v559 = vadd.f32 %v322, %v395
        %v560 = vadd.f32 %v319, %v396
        %v561 = vadd.f32 %v320, %v396
        %v562 = vadd.f32 %v321, %v396
        %v563 = vadd.f32 %v322, %v396
        %v564 = vadd.f32 %v319, %v397
        %v565 = vadd.f32 %v320, %v397
        %v566 = vadd.f32 %v321, %v397
        %v567 = vadd.f32 %v322, %v397
        %v568 = vadd.f32 %v319, %v398
        %v569 = vadd.f32 %v320, %v398
        %v570 = vadd.f32 %v321, %v398
        %v571 = vadd.f32 %v322, %v398
        %v572 = vadd.f32 %v319, %v399
        %v573 = vadd.f32 %v320, %v399
        %v574 = vadd.f32 %v321, %v399
        %v575 = vadd.f32 %v322, %v399
        %v576 = vadd.f32 %v319, %v400
        %v577 = vadd.f32 %v320, %v400
        %v578 = vadd.f32 %v321, %v400
        %v579 = vadd.f32 %v322, %v400
        %v580 = vadd.f32 %v319, %v401
        %v581 = vadd.f32 %v320, %v401
        %v582 = vadd.f32 %v321, %v401
        %v583 = vadd.f32 %v322, %v401
        %v584 = vadd.f32 %v319, %v402
        %v585 = vadd.f32 %v320, %v402
        %v586 = vadd.f32 %v321, %v402
        %v587 = vadd.f32 %v322, %v402
        %v588 = vadd.f32 %v319, %v403
        %v589 = vadd.f32 %v320, %v403
        %v590 = vadd.f32 %v321, %v403
        %v591 = vadd.f32 %v322, %v403
        %v592 = vadd.f32 %v319, %v404
        %v593 = vadd.f32 %v320, %v404
        %v594 = vadd.f32 %v321, %v404
        %v595 = vadd.f32 %v322, %v404
        %v596 = vadd.f32 %v319, %v405
        %v597 = vadd.f32 %v320, %v405
        %v598 = vadd.f32 %v321, %v405
        %v599 = vadd.f32 %v322, %v405
        %v600 = vadd.f32 %v319, %v406
        %v601 = vadd.f32 %v320, %v406
        %v602 = vadd.f32 %v321, %v406
        %v603 = vadd.f32 %v322, %v406
        %v604 = vadd.f32 %v319, %v407
        %v605 = vadd.f32 %v320, %v407
        %v606 = vadd.f32 %v321, %v407
        %v607 = vadd.f32 %v322, %v407
        %vm608 = vcmask 80896
        %v609 = vsel %vm608, %v448, -inf
        %610 = vmax.xlane.f32.xlu0 %v609
        %v611 = vpop.xlane.xlu0 %610
        %v612 = vsel %vm608, %v449, -inf
        %613 = vmax.xlane.f32.xlu0 %v612
        %v614 = vpop.xlane.xlu0 %613
        %v615 = vsel %vm608, %v450, -inf
        %616 = vmax.xlane.f32.xlu0 %v615
        %v617 = vpop.xlane.xlu0 %616
        %v618 = vsel %vm608, %v451, -inf
        %619 = vmax.xlane.f32.xlu0 %v618
        %v620 = vpop.xlane.xlu0 %619
        %v621 = vsel %vm608, %v452, -inf
        %622 = vmax.xlane.f32.xlu0 %v621
        %v623 = vpop.xlane.xlu0 %622
        %v624 = vsel %vm608, %v453, -inf
        %625 = vmax.xlane.f32.xlu0 %v624
        %v626 = vpop.xlane.xlu0 %625
        %v627 = vsel %vm608, %v454, -inf
        %628 = vmax.xlane.f32.xlu0 %v627
        %v629 = vpop.xlane.xlu0 %628
        %v630 = vsel %vm608, %v455, -inf
        %631 = vmax.xlane.f32.xlu0 %v630
        %v632 = vpop.xlane.xlu0 %631
        %v633 = vsel %vm608, %v456, -inf
        %634 = vmax.xlane.f32.xlu0 %v633
        %v635 = vpop.xlane.xlu0 %634
        %v636 = vsel %vm608, %v457, -inf
        %637 = vmax.xlane.f32.xlu0 %v636
        %v638 = vpop.xlane.xlu0 %637
        %v639 = vsel %vm608, %v458, -inf
        %640 = vmax.xlane.f32.xlu0 %v639
        %v641 = vpop.xlane.xlu0 %640
        %v642 = vsel %vm608, %v459, -inf
        %643 = vmax.xlane.f32.xlu0 %v642
        %v644 = vpop.xlane.xlu0 %643
        %v645 = vsel %vm608, %v460, -inf
        %646 = vmax.xlane.f32.xlu0 %v645
        %v647 = vpop.xlane.xlu0 %646
        %v648 = vsel %vm608, %v461, -inf
        %649 = vmax.xlane.f32.xlu0 %v648
        %v650 = vpop.xlane.xlu0 %649
        %v651 = vsel %vm608, %v462, -inf
        %652 = vmax.xlane.f32.xlu0 %v651
        %v653 = vpop.xlane.xlu0 %652
        %v654 = vsel %vm608, %v463, -inf
        %655 = vmax.xlane.f32.xlu0 %v654
        %v656 = vpop.xlane.xlu0 %655
        %v657 = vsel %vm608, %v464, -inf
        %658 = vmax.xlane.f32.xlu0 %v657
        %v659 = vpop.xlane.xlu0 %658
        %v660 = vsel %vm608, %v465, -inf
        %661 = vmax.xlane.f32.xlu0 %v660
        %v662 = vpop.xlane.xlu0 %661
        %v663 = vsel %vm608, %v466, -inf
        %664 = vmax.xlane.f32.xlu0 %v663
        %v665 = vpop.xlane.xlu0 %664
        %v666 = vsel %vm608, %v467, -inf
        %667 = vmax.xlane.f32.xlu0 %v666
        %v668 = vpop.xlane.xlu0 %667
        %v669 = vsel %vm608, %v468, -inf
        %670 = vmax.xlane.f32.xlu0 %v669
        %v671 = vpop.xlane.xlu0 %670
        %v672 = vsel %vm608, %v469, -inf
        %673 = vmax.xlane.f32.xlu0 %v672
        %v674 = vpop.xlane.xlu0 %673
        %v675 = vsel %vm608, %v470, -inf
        %676 = vmax.xlane.f32.xlu0 %v675
        %v677 = vpop.xlane.xlu0 %676
        %v678 = vsel %vm608, %v471, -inf
        %679 = vmax.xlane.f32.xlu0 %v678
        %v680 = vpop.xlane.xlu0 %679
        %v681 = vsel %vm608, %v472, -inf
        %682 = vmax.xlane.f32.xlu0 %v681
        %v683 = vpop.xlane.xlu0 %682
        %v684 = vsel %vm608, %v473, -inf
        %685 = vmax.xlane.f32.xlu0 %v684
        %v686 = vpop.xlane.xlu0 %685
        %v687 = vsel %vm608, %v474, -inf
        %688 = vmax.xlane.f32.xlu0 %v687
        %v689 = vpop.xlane.xlu0 %688
        %v690 = vsel %vm608, %v475, -inf
        %691 = vmax.xlane.f32.xlu0 %v690
        %v692 = vpop.xlane.xlu0 %691
        %v693 = vsel %vm608, %v476, -inf
        %694 = vmax.xlane.f32.xlu0 %v693
        %v695 = vpop.xlane.xlu0 %694
        %v696 = vsel %vm608, %v477, -inf
        %697 = vmax.xlane.f32.xlu0 %v696
        %v698 = vpop.xlane.xlu0 %697
        %v699 = vsel %vm608, %v478, -inf
        %700 = vmax.xlane.f32.xlu0 %v699
        %v701 = vpop.xlane.xlu0 %700
        %v702 = vsel %vm608, %v479, -inf
        %703 = vmax.xlane.f32.xlu0 %v702
        %v704 = vpop.xlane.xlu0 %703
        %v705 = vsel %vm608, %v480, -inf
        %706 = vmax.xlane.f32.xlu0 %v705
        %v707 = vpop.xlane.xlu0 %706
        %v708 = vsel %vm608, %v481, -inf
        %709 = vmax.xlane.f32.xlu0 %v708
        %v710 = vpop.xlane.xlu0 %709
        %v711 = vsel %vm608, %v482, -inf
        %712 = vmax.xlane.f32.xlu0 %v711
        %v713 = vpop.xlane.xlu0 %712
        %v714 = vsel %vm608, %v483, -inf
        %715 = vmax.xlane.f32.xlu0 %v714
        %v716 = vpop.xlane.xlu0 %715
        %v717 = vsel %vm608, %v484, -inf
        %718 = vmax.xlane.f32.xlu0 %v717
        %v719 = vpop.xlane.xlu0 %718
        %v720 = vsel %vm608, %v485, -inf
        %721 = vmax.xlane.f32.xlu0 %v720
        %v722 = vpop.xlane.xlu0 %721
        %v723 = vsel %vm608, %v486, -inf
        %724 = vmax.xlane.f32.xlu0 %v723
        %v725 = vpop.xlane.xlu0 %724
        %v726 = vsel %vm608, %v487, -inf
        %727 = vmax.xlane.f32.xlu0 %v726
        %v728 = vpop.xlane.xlu0 %727
        %v729 = vsel %vm608, %v488, -inf
        %730 = vmax.xlane.f32.xlu0 %v729
        %v731 = vpop.xlane.xlu0 %730
        %v732 = vsel %vm608, %v489, -inf
        %733 = vmax.xlane.f32.xlu0 %v732
        %v734 = vpop.xlane.xlu0 %733
        %v735 = vsel %vm608, %v490, -inf
        %736 = vmax.xlane.f32.xlu0 %v735
        %v737 = vpop.xlane.xlu0 %736
        %v738 = vsel %vm608, %v491, -inf
        %739 = vmax.xlane.f32.xlu0 %v738
        %v740 = vpop.xlane.xlu0 %739
        %v741 = vsel %vm608, %v492, -inf
        %742 = vmax.xlane.f32.xlu0 %v741
        %v743 = vpop.xlane.xlu0 %742
        %v744 = vsel %vm608, %v493, -inf
        %745 = vmax.xlane.f32.xlu0 %v744
        %v746 = vpop.xlane.xlu0 %745
        %v747 = vsel %vm608, %v494, -inf
        %748 = vmax.xlane.f32.xlu0 %v747
        %v749 = vpop.xlane.xlu0 %748
        %v750 = vsel %vm608, %v495, -inf
        %751 = vmax.xlane.f32.xlu0 %v750
        %v752 = vpop.xlane.xlu0 %751
        %v753 = vsel %vm608, %v496, -inf
        %754 = vmax.xlane.f32.xlu0 %v753
        %v755 = vpop.xlane.xlu0 %754
        %v756 = vsel %vm608, %v497, -inf
        %757 = vmax.xlane.f32.xlu0 %v756
        %v758 = vpop.xlane.xlu0 %757
        %v759 = vsel %vm608, %v498, -inf
        %760 = vmax.xlane.f32.xlu0 %v759
        %v761 = vpop.xlane.xlu0 %760
        %v762 = vsel %vm608, %v499, -inf
        %763 = vmax.xlane.f32.xlu0 %v762
        %v764 = vpop.xlane.xlu0 %763
        %v765 = vsel %vm608, %v500, -inf
        %766 = vmax.xlane.f32.xlu0 %v765
        %v767 = vpop.xlane.xlu0 %766
        %v768 = vsel %vm608, %v501, -inf
        %769 = vmax.xlane.f32.xlu0 %v768
        %v770 = vpop.xlane.xlu0 %769
        %v771 = vsel %vm608, %v502, -inf
        %772 = vmax.xlane.f32.xlu0 %v771
        %v773 = vpop.xlane.xlu0 %772
        %v774 = vsel %vm608, %v503, -inf
        %775 = vmax.xlane.f32.xlu0 %v774
        %v776 = vpop.xlane.xlu0 %775
        %v777 = vsel %vm608, %v504, -inf
        %778 = vmax.xlane.f32.xlu0 %v777
        %v779 = vpop.xlane.xlu0 %778
        %v780 = vsel %vm608, %v505, -inf
        %781 = vmax.xlane.f32.xlu0 %v780
        %v782 = vpop.xlane.xlu0 %781
        %v783 = vsel %vm608, %v506, -inf
        %784 = vmax.xlane.f32.xlu0 %v783
        %v785 = vpop.xlane.xlu0 %784
        %v786 = vsel %vm608, %v507, -inf
        %787 = vmax.xlane.f32.xlu0 %v786
        %v788 = vpop.xlane.xlu0 %787
        %v789 = vsel %vm608, %v508, -inf
        %790 = vmax.xlane.f32.xlu0 %v789
        %v791 = vpop.xlane.xlu0 %790
        %v792 = vsel %vm608, %v509, -inf
        %793 = vmax.xlane.f32.xlu0 %v792
        %v794 = vpop.xlane.xlu0 %793
        %v795 = vsel %vm608, %v510, -inf
        %796 = vmax.xlane.f32.xlu0 %v795
        %v797 = vpop.xlane.xlu0 %796
        %v798 = vsel %vm608, %v511, -inf
        %799 = vmax.xlane.f32.xlu0 %v798
        %v800 = vpop.xlane.xlu0 %799
        %v801 = vsel %vm608, %v512, -inf
        %802 = vmax.xlane.f32.xlu0 %v801
        %v803 = vpop.xlane.xlu0 %802
        %v804 = vsel %vm608, %v513, -inf
        %805 = vmax.xlane.f32.xlu0 %v804
        %v806 = vpop.xlane.xlu0 %805
        %v807 = vsel %vm608, %v514, -inf
        %808 = vmax.xlane.f32.xlu0 %v807
        %v809 = vpop.xlane.xlu0 %808
        %v810 = vsel %vm608, %v515, -inf
        %811 = vmax.xlane.f32.xlu0 %v810
        %v812 = vpop.xlane.xlu0 %811
        %v813 = vsel %vm608, %v516, -inf
        %814 = vmax.xlane.f32.xlu0 %v813
        %v815 = vpop.xlane.xlu0 %814
        %v816 = vsel %vm608, %v517, -inf
        %817 = vmax.xlane.f32.xlu0 %v816
        %v818 = vpop.xlane.xlu0 %817
        %v819 = vsel %vm608, %v518, -inf
        %820 = vmax.xlane.f32.xlu0 %v819
        %v821 = vpop.xlane.xlu0 %820
        %v822 = vsel %vm608, %v519, -inf
        %823 = vmax.xlane.f32.xlu0 %v822
        %v824 = vpop.xlane.xlu0 %823
        %v825 = vsel %vm608, %v520, -inf
        %826 = vmax.xlane.f32.xlu0 %v825
        %v827 = vpop.xlane.xlu0 %826
        %v828 = vsel %vm608, %v521, -inf
        %829 = vmax.xlane.f32.xlu0 %v828
        %v830 = vpop.xlane.xlu0 %829
        %v831 = vsel %vm608, %v522, -inf
        %832 = vmax.xlane.f32.xlu0 %v831
        %v833 = vpop.xlane.xlu0 %832
        %v834 = vsel %vm608, %v523, -inf
        %835 = vmax.xlane.f32.xlu0 %v834
        %v836 = vpop.xlane.xlu0 %835
        %v837 = vsel %vm608, %v524, -inf
        %838 = vmax.xlane.f32.xlu0 %v837
        %v839 = vpop.xlane.xlu0 %838
        %v840 = vsel %vm608, %v525, -inf
        %841 = vmax.xlane.f32.xlu0 %v840
        %v842 = vpop.xlane.xlu0 %841
        %v843 = vsel %vm608, %v526, -inf
        %844 = vmax.xlane.f32.xlu0 %v843
        %v845 = vpop.xlane.xlu0 %844
        %v846 = vsel %vm608, %v527, -inf
        %847 = vmax.xlane.f32.xlu0 %v846
        %v848 = vpop.xlane.xlu0 %847
        %v849 = vsel %vm608, %v528, -inf
        %850 = vmax.xlane.f32.xlu0 %v849
        %v851 = vpop.xlane.xlu0 %850
        %v852 = vsel %vm608, %v529, -inf
        %853 = vmax.xlane.f32.xlu0 %v852
        %v854 = vpop.xlane.xlu0 %853
        %v855 = vsel %vm608, %v530, -inf
        %856 = vmax.xlane.f32.xlu0 %v855
        %v857 = vpop.xlane.xlu0 %856
        %v858 = vsel %vm608, %v531, -inf
        %859 = vmax.xlane.f32.xlu0 %v858
        %v860 = vpop.xlane.xlu0 %859
        %v861 = vsel %vm608, %v532, -inf
        %862 = vmax.xlane.f32.xlu0 %v861
        %v863 = vpop.xlane.xlu0 %862
        %v864 = vsel %vm608, %v533, -inf
        %865 = vmax.xlane.f32.xlu0 %v864
        %v866 = vpop.xlane.xlu0 %865
        %v867 = vsel %vm608, %v534, -inf
        %868 = vmax.xlane.f32.xlu0 %v867
        %v869 = vpop.xlane.xlu0 %868
        %v870 = vsel %vm608, %v535, -inf
        %871 = vmax.xlane.f32.xlu0 %v870
        %v872 = vpop.xlane.xlu0 %871
        %v873 = vsel %vm608, %v536, -inf
        %874 = vmax.xlane.f32.xlu0 %v873
        %v875 = vpop.xlane.xlu0 %874
        %v876 = vsel %vm608, %v537, -inf
        %877 = vmax.xlane.f32.xlu0 %v876
        %v878 = vpop.xlane.xlu0 %877
        %v879 = vsel %vm608, %v538, -inf
        %880 = vmax.xlane.f32.xlu0 %v879
        %v881 = vpop.xlane.xlu0 %880
        %v882 = vsel %vm608, %v539, -inf
        %883 = vmax.xlane.f32.xlu0 %v882
        %v884 = vpop.xlane.xlu0 %883
        %v885 = vsel %vm608, %v540, -inf
        %886 = vmax.xlane.f32.xlu0 %v885
        %v887 = vpop.xlane.xlu0 %886
        %v888 = vsel %vm608, %v541, -inf
        %889 = vmax.xlane.f32.xlu0 %v888
        %v890 = vpop.xlane.xlu0 %889
        %v891 = vsel %vm608, %v542, -inf
        %892 = vmax.xlane.f32.xlu0 %v891
        %v893 = vpop.xlane.xlu0 %892
        %v894 = vsel %vm608, %v543, -inf
        %895 = vmax.xlane.f32.xlu0 %v894
        %v896 = vpop.xlane.xlu0 %895
        %v897 = vsel %vm608, %v544, -inf
        %898 = vmax.xlane.f32.xlu0 %v897
        %v899 = vpop.xlane.xlu0 %898
        %v900 = vsel %vm608, %v545, -inf
        %901 = vmax.xlane.f32.xlu0 %v900
        %v902 = vpop.xlane.xlu0 %901
        %v903 = vsel %vm608, %v546, -inf
        %904 = vmax.xlane.f32.xlu0 %v903
        %v905 = vpop.xlane.xlu0 %904
        %v906 = vsel %vm608, %v547, -inf
        %907 = vmax.xlane.f32.xlu0 %v906
        %v908 = vpop.xlane.xlu0 %907
        %v909 = vsel %vm608, %v548, -inf
        %910 = vmax.xlane.f32.xlu0 %v909
        %v911 = vpop.xlane.xlu0 %910
        %v912 = vsel %vm608, %v549, -inf
        %913 = vmax.xlane.f32.xlu0 %v912
        %v914 = vpop.xlane.xlu0 %913
        %v915 = vsel %vm608, %v550, -inf
        %916 = vmax.xlane.f32.xlu0 %v915
        %v917 = vpop.xlane.xlu0 %916
        %v918 = vsel %vm608, %v551, -inf
        %919 = vmax.xlane.f32.xlu0 %v918
        %v920 = vpop.xlane.xlu0 %919
        %v921 = vsel %vm608, %v552, -inf
        %922 = vmax.xlane.f32.xlu0 %v921
        %v923 = vpop.xlane.xlu0 %922
        %v924 = vsel %vm608, %v553, -inf
        %925 = vmax.xlane.f32.xlu0 %v924
        %v926 = vpop.xlane.xlu0 %925
        %v927 = vsel %vm608, %v554, -inf
        %928 = vmax.xlane.f32.xlu0 %v927
        %v929 = vpop.xlane.xlu0 %928
        %v930 = vsel %vm608, %v555, -inf
        %931 = vmax.xlane.f32.xlu0 %v930
        %v932 = vpop.xlane.xlu0 %931
        %v933 = vsel %vm608, %v556, -inf
        %934 = vmax.xlane.f32.xlu0 %v933
        %v935 = vpop.xlane.xlu0 %934
        %v936 = vsel %vm608, %v557, -inf
        %937 = vmax.xlane.f32.xlu0 %v936
        %v938 = vpop.xlane.xlu0 %937
        %v939 = vsel %vm608, %v558, -inf
        %940 = vmax.xlane.f32.xlu0 %v939
        %v941 = vpop.xlane.xlu0 %940
        %v942 = vsel %vm608, %v559, -inf
        %943 = vmax.xlane.f32.xlu0 %v942
        %v944 = vpop.xlane.xlu0 %943
        %v945 = vsel %vm608, %v560, -inf
        %946 = vmax.xlane.f32.xlu0 %v945
        %v947 = vpop.xlane.xlu0 %946
        %v948 = vsel %vm608, %v561, -inf
        %949 = vmax.xlane.f32.xlu0 %v948
        %v950 = vpop.xlane.xlu0 %949
        %v951 = vsel %vm608, %v562, -inf
        %952 = vmax.xlane.f32.xlu0 %v951
        %v953 = vpop.xlane.xlu0 %952
        %v954 = vsel %vm608, %v563, -inf
        %955 = vmax.xlane.f32.xlu0 %v954
        %v956 = vpop.xlane.xlu0 %955
        %v957 = vsel %vm608, %v564, -inf
        %958 = vmax.xlane.f32.xlu0 %v957
        %v959 = vpop.xlane.xlu0 %958
        %v960 = vsel %vm608, %v565, -inf
        %961 = vmax.xlane.f32.xlu0 %v960
        %v962 = vpop.xlane.xlu0 %961
        %v963 = vsel %vm608, %v566, -inf
        %964 = vmax.xlane.f32.xlu0 %v963
        %v965 = vpop.xlane.xlu0 %964
        %v966 = vsel %vm608, %v567, -inf
        %967 = vmax.xlane.f32.xlu0 %v966
        %v968 = vpop.xlane.xlu0 %967
        %v969 = vsel %vm608, %v568, -inf
        %970 = vmax.xlane.f32.xlu0 %v969
        %v971 = vpop.xlane.xlu0 %970
        %v972 = vsel %vm608, %v569, -inf
        %973 = vmax.xlane.f32.xlu0 %v972
        %v974 = vpop.xlane.xlu0 %973
        %v975 = vsel %vm608, %v570, -inf
        %976 = vmax.xlane.f32.xlu0 %v975
        %v977 = vpop.xlane.xlu0 %976
        %v978 = vsel %vm608, %v571, -inf
        %979 = vmax.xlane.f32.xlu0 %v978
        %v980 = vpop.xlane.xlu0 %979
        %v981 = vsel %vm608, %v572, -inf
        %982 = vmax.xlane.f32.xlu0 %v981
        %v983 = vpop.xlane.xlu0 %982
        %v984 = vsel %vm608, %v573, -inf
        %985 = vmax.xlane.f32.xlu0 %v984
        %v986 = vpop.xlane.xlu0 %985
        %v987 = vsel %vm608, %v574, -inf
        %988 = vmax.xlane.f32.xlu0 %v987
        %v989 = vpop.xlane.xlu0 %988
        %v990 = vsel %vm608, %v575, -inf
        %991 = vmax.xlane.f32.xlu0 %v990
        %v992 = vpop.xlane.xlu0 %991
        %v993 = vsel %vm608, %v576, -inf
        %994 = vmax.xlane.f32.xlu0 %v993
        %v995 = vpop.xlane.xlu0 %994
        %v996 = vsel %vm608, %v577, -inf
        %997 = vmax.xlane.f32.xlu0 %v996
        %v998 = vpop.xlane.xlu0 %997
        %v999 = vsel %vm608, %v578, -inf
        %1000 = vmax.xlane.f32.xlu0 %v999
        %v1001 = vpop.xlane.xlu0 %1000
        %v1002 = vsel %vm608, %v579, -inf
        %1003 = vmax.xlane.f32.xlu0 %v1002
        %v1004 = vpop.xlane.xlu0 %1003
        %v1005 = vsel %vm608, %v580, -inf
        %1006 = vmax.xlane.f32.xlu0 %v1005
        %v1007 = vpop.xlane.xlu0 %1006
        %v1008 = vsel %vm608, %v581, -inf
        %1009 = vmax.xlane.f32.xlu0 %v1008
        %v1010 = vpop.xlane.xlu0 %1009
        %v1011 = vsel %vm608, %v582, -inf
        %1012 = vmax.xlane.f32.xlu0 %v1011
        %v1013 = vpop.xlane.xlu0 %1012
        %v1014 = vsel %vm608, %v583, -inf
        %1015 = vmax.xlane.f32.xlu0 %v1014
        %v1016 = vpop.xlane.xlu0 %1015
        %v1017 = vsel %vm608, %v584, -inf
        %1018 = vmax.xlane.f32.xlu0 %v1017
        %v1019 = vpop.xlane.xlu0 %1018
        %v1020 = vsel %vm608, %v585, -inf
        %1021 = vmax.xlane.f32.xlu0 %v1020
        %v1022 = vpop.xlane.xlu0 %1021
        %v1023 = vsel %vm608, %v586, -inf
        %1024 = vmax.xlane.f32.xlu0 %v1023
        %v1025 = vpop.xlane.xlu0 %1024
        %v1026 = vsel %vm608, %v587, -inf
        %1027 = vmax.xlane.f32.xlu0 %v1026
        %v1028 = vpop.xlane.xlu0 %1027
        %v1029 = vsel %vm608, %v588, -inf
        %1030 = vmax.xlane.f32.xlu0 %v1029
        %v1031 = vpop.xlane.xlu0 %1030
        %v1032 = vsel %vm608, %v589, -inf
        %1033 = vmax.xlane.f32.xlu0 %v1032
        %v1034 = vpop.xlane.xlu0 %1033
        %v1035 = vsel %vm608, %v590, -inf
        %1036 = vmax.xlane.f32.xlu0 %v1035
        %v1037 = vpop.xlane.xlu0 %1036
        %v1038 = vsel %vm608, %v591, -inf
        %1039 = vmax.xlane.f32.xlu0 %v1038
        %v1040 = vpop.xlane.xlu0 %1039
        %v1041 = vsel %vm608, %v592, -inf
        %1042 = vmax.xlane.f32.xlu0 %v1041
        %v1043 = vpop.xlane.xlu0 %1042
        %v1044 = vsel %vm608, %v593, -inf
        %1045 = vmax.xlane.f32.xlu0 %v1044
        %v1046 = vpop.xlane.xlu0 %1045
        %v1047 = vsel %vm608, %v594, -inf
        %1048 = vmax.xlane.f32.xlu0 %v1047
        %v1049 = vpop.xlane.xlu0 %1048
        %v1050 = vsel %vm608, %v595, -inf
        %1051 = vmax.xlane.f32.xlu0 %v1050
        %v1052 = vpop.xlane.xlu0 %1051
        %v1053 = vsel %vm608, %v596, -inf
        %1054 = vmax.xlane.f32.xlu0 %v1053
        %v1055 = vpop.xlane.xlu0 %1054
        %v1056 = vsel %vm608, %v597, -inf
        %1057 = vmax.xlane.f32.xlu0 %v1056
        %v1058 = vpop.xlane.xlu0 %1057
        %v1059 = vsel %vm608, %v598, -inf
        %1060 = vmax.xlane.f32.xlu0 %v1059
        %v1061 = vpop.xlane.xlu0 %1060
        %v1062 = vsel %vm608, %v599, -inf
        %1063 = vmax.xlane.f32.xlu0 %v1062
        %v1064 = vpop.xlane.xlu0 %1063
        %v1065 = vsel %vm608, %v600, -inf
        %1066 = vmax.xlane.f32.xlu0 %v1065
        %v1067 = vpop.xlane.xlu0 %1066
        %v1068 = vsel %vm608, %v601, -inf
        %1069 = vmax.xlane.f32.xlu0 %v1068
        %v1070 = vpop.xlane.xlu0 %1069
        %v1071 = vsel %vm608, %v602, -inf
        %1072 = vmax.xlane.f32.xlu0 %v1071
        %v1073 = vpop.xlane.xlu0 %1072
        %v1074 = vsel %vm608, %v603, -inf
        %1075 = vmax.xlane.f32.xlu0 %v1074
        %v1076 = vpop.xlane.xlu0 %1075
        %v1077 = vsel %vm608, %v604, -inf
        %1078 = vmax.xlane.f32.xlu0 %v1077
        %v1079 = vpop.xlane.xlu0 %1078
        %v1080 = vsel %vm608, %v605, -inf
        %1081 = vmax.xlane.f32.xlu0 %v1080
        %v1082 = vpop.xlane.xlu0 %1081
        %v1083 = vsel %vm608, %v606, -inf
        %1084 = vmax.xlane.f32.xlu0 %v1083
        %v1085 = vpop.xlane.xlu0 %1084
        %v1086 = vsel %vm608, %v607, -inf
        %1087 = vmax.xlane.f32.xlu0 %v1086
        %v1088 = vpop.xlane.xlu0 %1087
        %v1089 = vld [vmem:[%s317] sm:$0x1]
        %v1090 = vpack.c.bf16 %v614, %v611
        %v1091 = vpack.c.bf16 %v620, %v617
        %v1092 = vpack.c.bf16 %v626, %v623
        %v1093 = vpack.c.bf16 %v632, %v629
        %v1094 = vpack.c.bf16 %v638, %v635
        %v1095 = vpack.c.bf16 %v644, %v641
        %v1096 = vpack.c.bf16 %v650, %v647
        %v1097 = vpack.c.bf16 %v656, %v653
        %v1098 = vpack.c.bf16 %v662, %v659
        %v1099 = vpack.c.bf16 %v668, %v665
        %v1100 = vpack.c.bf16 %v674, %v671
        %v1101 = vpack.c.bf16 %v680, %v677
        %v1102 = vpack.c.bf16 %v686, %v683
        %v1103 = vpack.c.bf16 %v692, %v689
        %v1104 = vpack.c.bf16 %v698, %v695
        %v1105 = vpack.c.bf16 %v704, %v701
        %v1106 = vpack.c.bf16 %v710, %v707
        %v1107 = vpack.c.bf16 %v716, %v713
        %v1108 = vpack.c.bf16 %v722, %v719
        %v1109 = vpack.c.bf16 %v728, %v725
        %v1110 = vpack.c.bf16 %v734, %v731
        %v1111 = vpack.c.bf16 %v740, %v737
        %v1112 = vpack.c.bf16 %v746, %v743
        %v1113 = vpack.c.bf16 %v752, %v749
        %v1114 = vpack.c.bf16 %v758, %v755
        %v1115 = vpack.c.bf16 %v764, %v761
        %v1116 = vpack.c.bf16 %v770, %v767
        %v1117 = vpack.c.bf16 %v776, %v773
        %v1118 = vpack.c.bf16 %v782, %v779
        %v1119 = vpack.c.bf16 %v788, %v785
        %v1120 = vpack.c.bf16 %v794, %v791
        %v1121 = vpack.c.bf16 %v800, %v797
        %v1122 = vpack.c.bf16 %v806, %v803
        %v1123 = vpack.c.bf16 %v812, %v809
        %v1124 = vpack.c.bf16 %v818, %v815
        %v1125 = vpack.c.bf16 %v824, %v821
        %v1126 = vpack.c.bf16 %v830, %v827
        %v1127 = vpack.c.bf16 %v836, %v833
        %v1128 = vpack.c.bf16 %v842, %v839
        %v1129 = vpack.c.bf16 %v848, %v845
        %v1130 = vpack.c.bf16 %v854, %v851
        %v1131 = vpack.c.bf16 %v860, %v857
        %v1132 = vpack.c.bf16 %v866, %v863
        %v1133 = vpack.c.bf16 %v872, %v869
        %v1134 = vpack.c.bf16 %v878, %v875
        %v1135 = vpack.c.bf16 %v884, %v881
        %v1136 = vpack.c.bf16 %v890, %v887
        %v1137 = vpack.c.bf16 %v896, %v893
        %v1138 = vpack.c.bf16 %v902, %v899
        %v1139 = vpack.c.bf16 %v908, %v905
        %v1140 = vpack.c.bf16 %v914, %v911
        %v1141 = vpack.c.bf16 %v920, %v917
        %v1142 = vpack.c.bf16 %v926, %v923
        %v1143 = vpack.c.bf16 %v932, %v929
        %v1144 = vpack.c.bf16 %v938, %v935
        %v1145 = vpack.c.bf16 %v944, %v941
        %v1146 = vpack.c.bf16 %v950, %v947
        %v1147 = vpack.c.bf16 %v956, %v953
        %v1148 = vpack.c.bf16 %v962, %v959
        %v1149 = vpack.c.bf16 %v968, %v965
        %v1150 = vpack.c.bf16 %v974, %v971
        %v1151 = vpack.c.bf16 %v980, %v977
        %v1152 = vpack.c.bf16 %v986, %v983
        %v1153 = vpack.c.bf16 %v992, %v989
        %v1154 = vpack.c.bf16 %v998, %v995
        %v1155 = vpack.c.bf16 %v1004, %v1001
        %v1156 = vpack.c.bf16 %v1010, %v1007
        %v1157 = vpack.c.bf16 %v1016, %v1013
        %v1158 = vpack.c.bf16 %v1022, %v1019
        %v1159 = vpack.c.bf16 %v1028, %v1025
        %v1160 = vpack.c.bf16 %v1034, %v1031
        %v1161 = vpack.c.bf16 %v1040, %v1037
        %v1162 = vpack.c.bf16 %v1046, %v1043
        %v1163 = vpack.c.bf16 %v1052, %v1049
        %v1164 = vpack.c.bf16 %v1058, %v1055
        %v1165 = vpack.c.bf16 %v1064, %v1061
        %v1166 = vpack.c.bf16 %v1070, %v1067
        %v1167 = vpack.c.bf16 %v1076, %v1073
        %v1168 = vpack.c.bf16 %v1082, %v1079
        %v1169 = vpack.c.bf16 %v1088, %v1085
        %v1170 = vld [vmem:[%s3] sm:$0xf]
        %v1171 = vld [vmem:[%s3 + $0x4] sm:$0xf]
        %v1172 = vld [vmem:[%s3 + $0x8] sm:$0xf]
        %v1173 = vld [vmem:[%s3 + $0xc] sm:$0xf]
        %v1174 = vpack.c.bf16 %v1089, %v1089
        %v1175 = vld [vmem:[%s4] sm:$0xf]
        %v1176 = vld [vmem:[%s4 + $0x4] sm:$0xf]
        %v1177 = vld [vmem:[%s4 + $0x8] sm:$0xf]
        %v1178 = vld [vmem:[%s4 + $0xc] sm:$0xf]
        %v1183 = vunpack.c.l.b16 %v1175
        %v1184 = vunpack.c.l.b16 %v1176
        %v1185 = vunpack.c.l.b16 %v1177
        %v1186 = vunpack.c.l.b16 %v1178
        %v1187 = vpack.c.b16 %v1184, %v1183
        %v1188 = vpack.c.b16 %v1186, %v1185
        %vm1191 = vcmask 261120
        %v1193 = vsel %vm1191, %v1174, 0
        %1195 = vmatpush.bf16.msra.mxu0 0
        %1196 = vmatpush.bf16.msra.mxu0 0
        %1197 = vmatpush.bf16.msra.mxu0 0
        %1198 = vmatpush.bf16.msra.mxu0 0
        %1199 = vmatpush.bf16.msra.mxu0 0
        %1200 = vmatpush.bf16.msra.mxu0 0
        %1201 = vmatpush.bf16.msra.mxu0 %v1188
        %1202 = vmatpush.bf16.msra.mxu0 %v1187
        %1203 = vmatmul.bf16.gmra.mxu0 %v1193
        %v1204 = vpop.f32.mrf.mxu0
        %v1205 = vadd.f32 0.0, %v1204
        %v1206 = vpop.f32.mrf.mxu0
        %1207 = vdwg.mxu0
        %v1208 = vperm.slane %v1205, 0
        %v1289 = vunpack.c.l.b16 %v1090
        %v1290 = vunpack.c.h.b16 %v1090
        %v1291 = vunpack.c.l.b16 %v1091
        %v1292 = vunpack.c.h.b16 %v1091
        %v1293 = vunpack.c.l.b16 %v1092
        %v1294 = vunpack.c.h.b16 %v1092
        %v1295 = vunpack.c.l.b16 %v1093
        %v1296 = vunpack.c.h.b16 %v1093
        %v1297 = vunpack.c.l.b16 %v1094
        %v1298 = vunpack.c.h.b16 %v1094
        %v1299 = vunpack.c.l.b16 %v1095
        %v1300 = vunpack.c.h.b16 %v1095
        %v1301 = vunpack.c.l.b16 %v1096
        %v1302 = vunpack.c.h.b16 %v1096
        %v1303 = vunpack.c.l.b16 %v1097
        %v1304 = vunpack.c.h.b16 %v1097
        %v1305 = vunpack.c.l.b16 %v1098
        %v1306 = vunpack.c.h.b16 %v1098
        %v1307 = vunpack.c.l.b16 %v1099
        %v1308 = vunpack.c.h.b16 %v1099
        %v1309 = vunpack.c.l.b16 %v1100
        %v1310 = vunpack.c.h.b16 %v1100
        %v1311 = vunpack.c.l.b16 %v1101
        %v1312 = vunpack.c.h.b16 %v1101
        %v1313 = vunpack.c.l.b16 %v1102
        %v1314 = vunpack.c.h.b16 %v1102
        %v1315 = vunpack.c.l.b16 %v1103
        %v1316 = vunpack.c.h.b16 %v1103
        %v1317 = vunpack.c.l.b16 %v1104
        %v1318 = vunpack.c.h.b16 %v1104
        %v1319 = vunpack.c.l.b16 %v1105
        %v1320 = vunpack.c.h.b16 %v1105
        %v1321 = vunpack.c.l.b16 %v1106
        %v1322 = vunpack.c.h.b16 %v1106
        %v1323 = vunpack.c.l.b16 %v1107
        %v1324 = vunpack.c.h.b16 %v1107
        %v1325 = vunpack.c.l.b16 %v1108
        %v1326 = vunpack.c.h.b16 %v1108
        %v1327 = vunpack.c.l.b16 %v1109
        %v1328 = vunpack.c.h.b16 %v1109
        %v1329 = vunpack.c.l.b16 %v1110
        %v1330 = vunpack.c.h.b16 %v1110
        %v1331 = vunpack.c.l.b16 %v1111
        %v1332 = vunpack.c.h.b16 %v1111
        %v1333 = vunpack.c.l.b16 %v1112
        %v1334 = vunpack.c.h.b16 %v1112
        %v1335 = vunpack.c.l.b16 %v1113
        %v1336 = vunpack.c.h.b16 %v1113
        %v1337 = vunpack.c.l.b16 %v1114
        %v1338 = vunpack.c.h.b16 %v1114
        %v1339 = vunpack.c.l.b16 %v1115
        %v1340 = vunpack.c.h.b16 %v1115
        %v1341 = vunpack.c.l.b16 %v1116
        %v1342 = vunpack.c.h.b16 %v1116
        %v1343 = vunpack.c.l.b16 %v1117
        %v1344 = vunpack.c.h.b16 %v1117
        %v1345 = vunpack.c.l.b16 %v1118
        %v1346 = vunpack.c.h.b16 %v1118
        %v1347 = vunpack.c.l.b16 %v1119
        %v1348 = vunpack.c.h.b16 %v1119
        %v1349 = vunpack.c.l.b16 %v1120
        %v1350 = vunpack.c.h.b16 %v1120
        %v1351 = vunpack.c.l.b16 %v1121
        %v1352 = vunpack.c.h.b16 %v1121
        %v1353 = vunpack.c.l.b16 %v1122
        %v1354 = vunpack.c.h.b16 %v1122
        %v1355 = vunpack.c.l.b16 %v1123
        %v1356 = vunpack.c.h.b16 %v1123
        %v1357 = vunpack.c.l.b16 %v1124
        %v1358 = vunpack.c.h.b16 %v1124
        %v1359 = vunpack.c.l.b16 %v1125
        %v1360 = vunpack.c.h.b16 %v1125
        %v1361 = vunpack.c.l.b16 %v1126
        %v1362 = vunpack.c.h.b16 %v1126
        %v1363 = vunpack.c.l.b16 %v1127
        %v1364 = vunpack.c.h.b16 %v1127
        %v1365 = vunpack.c.l.b16 %v1128
        %v1366 = vunpack.c.h.b16 %v1128
        %v1367 = vunpack.c.l.b16 %v1129
        %v1368 = vunpack.c.h.b16 %v1129
        %v1369 = vunpack.c.l.b16 %v1130
        %v1370 = vunpack.c.h.b16 %v1130
        %v1371 = vunpack.c.l.b16 %v1131
        %v1372 = vunpack.c.h.b16 %v1131
        %v1373 = vunpack.c.l.b16 %v1132
        %v1374 = vunpack.c.h.b16 %v1132
        %v1375 = vunpack.c.l.b16 %v1133
        %v1376 = vunpack.c.h.b16 %v1133
        %v1377 = vunpack.c.l.b16 %v1134
        %v1378 = vunpack.c.h.b16 %v1134
        %v1379 = vunpack.c.l.b16 %v1135
        %v1380 = vunpack.c.h.b16 %v1135
        %v1381 = vunpack.c.l.b16 %v1136
        %v1382 = vunpack.c.h.b16 %v1136
        %v1383 = vunpack.c.l.b16 %v1137
        %v1384 = vunpack.c.h.b16 %v1137
        %v1385 = vunpack.c.l.b16 %v1138
        %v1386 = vunpack.c.h.b16 %v1138
        %v1387 = vunpack.c.l.b16 %v1139
        %v1388 = vunpack.c.h.b16 %v1139
        %v1389 = vunpack.c.l.b16 %v1140
        %v1390 = vunpack.c.h.b16 %v1140
        %v1391 = vunpack.c.l.b16 %v1141
        %v1392 = vunpack.c.h.b16 %v1141
        %v1393 = vunpack.c.l.b16 %v1142
        %v1394 = vunpack.c.h.b16 %v1142
        %v1395 = vunpack.c.l.b16 %v1143
        %v1396 = vunpack.c.h.b16 %v1143
        %v1397 = vunpack.c.l.b16 %v1144
        %v1398 = vunpack.c.h.b16 %v1144
        %v1399 = vunpack.c.l.b16 %v1145
        %v1400 = vunpack.c.h.b16 %v1145
        %v1401 = vunpack.c.l.b16 %v1146
        %v1402 = vunpack.c.h.b16 %v1146
        %v1403 = vunpack.c.l.b16 %v1147
        %v1404 = vunpack.c.h.b16 %v1147
        %v1405 = vunpack.c.l.b16 %v1148
        %v1406 = vunpack.c.h.b16 %v1148
        %v1407 = vunpack.c.l.b16 %v1149
        %v1408 = vunpack.c.h.b16 %v1149
        %v1409 = vunpack.c.l.b16 %v1150
        %v1410 = vunpack.c.h.b16 %v1150
        %v1411 = vunpack.c.l.b16 %v1151
        %v1412 = vunpack.c.h.b16 %v1151
        %v1413 = vunpack.c.l.b16 %v1152
        %v1414 = vunpack.c.h.b16 %v1152
        %v1415 = vunpack.c.l.b16 %v1153
        %v1416 = vunpack.c.h.b16 %v1153
        %v1417 = vunpack.c.l.b16 %v1154
        %v1418 = vunpack.c.h.b16 %v1154
        %v1419 = vunpack.c.l.b16 %v1155
        %v1420 = vunpack.c.h.b16 %v1155
        %v1421 = vunpack.c.l.b16 %v1156
        %v1422 = vunpack.c.h.b16 %v1156
        %v1423 = vunpack.c.l.b16 %v1157
        %v1424 = vunpack.c.h.b16 %v1157
        %v1425 = vunpack.c.l.b16 %v1158
        %v1426 = vunpack.c.h.b16 %v1158
        %v1427 = vunpack.c.l.b16 %v1159
        %v1428 = vunpack.c.h.b16 %v1159
        %v1429 = vunpack.c.l.b16 %v1160
        %v1430 = vunpack.c.h.b16 %v1160
        %v1431 = vunpack.c.l.b16 %v1161
        %v1432 = vunpack.c.h.b16 %v1161
        %v1433 = vunpack.c.l.b16 %v1162
        %v1434 = vunpack.c.h.b16 %v1162
        %v1435 = vunpack.c.l.b16 %v1163
        %v1436 = vunpack.c.h.b16 %v1163
        %v1437 = vunpack.c.l.b16 %v1164
        %v1438 = vunpack.c.h.b16 %v1164
        %v1439 = vunpack.c.l.b16 %v1165
        %v1440 = vunpack.c.h.b16 %v1165
        %v1441 = vunpack.c.l.b16 %v1166
        %v1442 = vunpack.c.h.b16 %v1166
        %v1443 = vunpack.c.l.b16 %v1167
        %v1444 = vunpack.c.h.b16 %v1167
        %v1445 = vunpack.c.l.b16 %v1168
        %v1446 = vunpack.c.h.b16 %v1168
        %v1447 = vunpack.c.l.b16 %v1169
        %v1448 = vunpack.c.h.b16 %v1169
        %v1449 = vlaneseq
        %v1450 = vand.u32 %v1449, 127
        %v1451 = vperm.slane %v1289, %v1450
        %v1452 = vadd.s32 %v1450, 4294967288
        %v1453 = vperm.slane %v1290, %v1452
        %vm1454 = vcmask 130112
        %v1455 = vsel %vm1454, %v1453, %v1451
        %v1456 = vadd.s32 %v1450, 4294967280
        %v1457 = vperm.slane %v1291, %v1456
        %vm1458 = vcmask 195712
        %v1459 = vsel %vm1458, %v1457, %v1455
        %v1460 = vadd.s32 %v1450, 4294967272
        %v1461 = vperm.slane %v1292, %v1460
        %vm1462 = vcmask 261312
        %v1463 = vsel %vm1462, %v1461, %v1459
        %v1464 = vperm.slane %v1293, %v1450
        %v1465 = vperm.slane %v1294, %v1452
        %v1466 = vsel %vm1454, %v1465, %v1464
        %v1467 = vperm.slane %v1295, %v1456
        %v1468 = vsel %vm1458, %v1467, %v1466
        %v1469 = vperm.slane %v1296, %v1460
        %v1470 = vsel %vm1462, %v1469, %v1468
        %v1471 = vperm.slane %v1297, %v1450
        %v1472 = vperm.slane %v1298, %v1452
        %v1473 = vsel %vm1454, %v1472, %v1471
        %v1474 = vperm.slane %v1299, %v1456
        %v1475 = vsel %vm1458, %v1474, %v1473
        %v1476 = vperm.slane %v1300, %v1460
        %v1477 = vsel %vm1462, %v1476, %v1475
        %v1478 = vperm.slane %v1301, %v1450
        %v1479 = vperm.slane %v1302, %v1452
        %v1480 = vsel %vm1454, %v1479, %v1478
        %v1481 = vperm.slane %v1303, %v1456
        %v1482 = vsel %vm1458, %v1481, %v1480
        %v1483 = vperm.slane %v1304, %v1460
        %v1484 = vsel %vm1462, %v1483, %v1482
        %v1485 = vperm.slane %v1305, %v1450
        %v1486 = vperm.slane %v1306, %v1452
        %v1487 = vsel %vm1454, %v1486, %v1485
        %v1488 = vperm.slane %v1307, %v1456
        %v1489 = vsel %vm1458, %v1488, %v1487
        %v1490 = vperm.slane %v1308, %v1460
        %v1491 = vsel %vm1462, %v1490, %v1489
        %v1492 = vperm.slane %v1309, %v1450
        %v1493 = vperm.slane %v1310, %v1452
        %v1494 = vsel %vm1454, %v1493, %v1492
        %v1495 = vperm.slane %v1311, %v1456
        %v1496 = vsel %vm1458, %v1495, %v1494
        %v1497 = vperm.slane %v1312, %v1460
        %v1498 = vsel %vm1462, %v1497, %v1496
        %v1499 = vperm.slane %v1313, %v1450
        %v1500 = vperm.slane %v1314, %v1452
        %v1501 = vsel %vm1454, %v1500, %v1499
        %v1502 = vperm.slane %v1315, %v1456
        %v1503 = vsel %vm1458, %v1502, %v1501
        %v1504 = vperm.slane %v1316, %v1460
        %v1505 = vsel %vm1462, %v1504, %v1503
        %v1506 = vperm.slane %v1317, %v1450
        %v1507 = vperm.slane %v1318, %v1452
        %v1508 = vsel %vm1454, %v1507, %v1506
        %v1509 = vperm.slane %v1319, %v1456
        %v1510 = vsel %vm1458, %v1509, %v1508
        %v1511 = vperm.slane %v1320, %v1460
        %v1512 = vsel %vm1462, %v1511, %v1510
        %v1513 = vperm.slane %v1321, %v1450
        %v1514 = vperm.slane %v1322, %v1452
        %v1515 = vsel %vm1454, %v1514, %v1513
        %v1516 = vperm.slane %v1323, %v1456
        %v1517 = vsel %vm1458, %v1516, %v1515
        %v1518 = vperm.slane %v1324, %v1460
        %v1519 = vsel %vm1462, %v1518, %v1517
        %v1520 = vperm.slane %v1325, %v1450
        %v1521 = vperm.slane %v1326, %v1452
        %v1522 = vsel %vm1454, %v1521, %v1520
        %v1523 = vperm.slane %v1327, %v1456
        %v1524 = vsel %vm1458, %v1523, %v1522
        %v1525 = vperm.slane %v1328, %v1460
        %v1526 = vsel %vm1462, %v1525, %v1524
        %v1527 = vperm.slane %v1329, %v1450
        %v1528 = vperm.slane %v1330, %v1452
        %v1529 = vsel %vm1454, %v1528, %v1527
        %v1530 = vperm.slane %v1331, %v1456
        %v1531 = vsel %vm1458, %v1530, %v1529
        %v1532 = vperm.slane %v1332, %v1460
        %v1533 = vsel %vm1462, %v1532, %v1531
        %v1534 = vperm.slane %v1333, %v1450
        %v1535 = vperm.slane %v1334, %v1452
        %v1536 = vsel %vm1454, %v1535, %v1534
        %v1537 = vperm.slane %v1335, %v1456
        %v1538 = vsel %vm1458, %v1537, %v1536
        %v1539 = vperm.slane %v1336, %v1460
        %v1540 = vsel %vm1462, %v1539, %v1538
        %v1541 = vperm.slane %v1337, %v1450
        %v1542 = vperm.slane %v1338, %v1452
        %v1543 = vsel %vm1454, %v1542, %v1541
        %v1544 = vperm.slane %v1339, %v1456
        %v1545 = vsel %vm1458, %v1544, %v1543
        %v1546 = vperm.slane %v1340, %v1460
        %v1547 = vsel %vm1462, %v1546, %v1545
        %v1548 = vperm.slane %v1341, %v1450
        %v1549 = vperm.slane %v1342, %v1452
        %v1550 = vsel %vm1454, %v1549, %v1548
        %v1551 = vperm.slane %v1343, %v1456
        %v1552 = vsel %vm1458, %v1551, %v1550
        %v1553 = vperm.slane %v1344, %v1460
        %v1554 = vsel %vm1462, %v1553, %v1552
        %v1555 = vperm.slane %v1345, %v1450
        %v1556 = vperm.slane %v1346, %v1452
        %v1557 = vsel %vm1454, %v1556, %v1555
        %v1558 = vperm.slane %v1347, %v1456
        %v1559 = vsel %vm1458, %v1558, %v1557
        %v1560 = vperm.slane %v1348, %v1460
        %v1561 = vsel %vm1462, %v1560, %v1559
        %v1562 = vperm.slane %v1349, %v1450
        %v1563 = vperm.slane %v1350, %v1452
        %v1564 = vsel %vm1454, %v1563, %v1562
        %v1565 = vperm.slane %v1351, %v1456
        %v1566 = vsel %vm1458, %v1565, %v1564
        %v1567 = vperm.slane %v1352, %v1460
        %v1568 = vsel %vm1462, %v1567, %v1566
        %v1569 = vperm.slane %v1353, %v1450
        %v1570 = vperm.slane %v1354, %v1452
        %v1571 = vsel %vm1454, %v1570, %v1569
        %v1572 = vperm.slane %v1355, %v1456
        %v1573 = vsel %vm1458, %v1572, %v1571
        %v1574 = vperm.slane %v1356, %v1460
        %v1575 = vsel %vm1462, %v1574, %v1573
        %v1576 = vperm.slane %v1357, %v1450
        %v1577 = vperm.slane %v1358, %v1452
        %v1578 = vsel %vm1454, %v1577, %v1576
        %v1579 = vperm.slane %v1359, %v1456
        %v1580 = vsel %vm1458, %v1579, %v1578
        %v1581 = vperm.slane %v1360, %v1460
        %v1582 = vsel %vm1462, %v1581, %v1580
        %v1583 = vperm.slane %v1361, %v1450
        %v1584 = vperm.slane %v1362, %v1452
        %v1585 = vsel %vm1454, %v1584, %v1583
        %v1586 = vperm.slane %v1363, %v1456
        %v1587 = vsel %vm1458, %v1586, %v1585
        %v1588 = vperm.slane %v1364, %v1460
        %v1589 = vsel %vm1462, %v1588, %v1587
        %v1590 = vperm.slane %v1365, %v1450
        %v1591 = vperm.slane %v1366, %v1452
        %v1592 = vsel %vm1454, %v1591, %v1590
        %v1593 = vperm.slane %v1367, %v1456
        %v1594 = vsel %vm1458, %v1593, %v1592
        %v1595 = vperm.slane %v1368, %v1460
        %v1596 = vsel %vm1462, %v1595, %v1594
        %v1597 = vperm.slane %v1369, %v1450
        %v1598 = vperm.slane %v1370, %v1452
        %v1599 = vsel %vm1454, %v1598, %v1597
        %v1600 = vperm.slane %v1371, %v1456
        %v1601 = vsel %vm1458, %v1600, %v1599
        %v1602 = vperm.slane %v1372, %v1460
        %v1603 = vsel %vm1462, %v1602, %v1601
        %v1604 = vperm.slane %v1373, %v1450
        %v1605 = vperm.slane %v1374, %v1452
        %v1606 = vsel %vm1454, %v1605, %v1604
        %v1607 = vperm.slane %v1375, %v1456
        %v1608 = vsel %vm1458, %v1607, %v1606
        %v1609 = vperm.slane %v1376, %v1460
        %v1610 = vsel %vm1462, %v1609, %v1608
        %v1611 = vperm.slane %v1377, %v1450
        %v1612 = vperm.slane %v1378, %v1452
        %v1613 = vsel %vm1454, %v1612, %v1611
        %v1614 = vperm.slane %v1379, %v1456
        %v1615 = vsel %vm1458, %v1614, %v1613
        %v1616 = vperm.slane %v1380, %v1460
        %v1617 = vsel %vm1462, %v1616, %v1615
        %v1618 = vperm.slane %v1381, %v1450
        %v1619 = vperm.slane %v1382, %v1452
        %v1620 = vsel %vm1454, %v1619, %v1618
        %v1621 = vperm.slane %v1383, %v1456
        %v1622 = vsel %vm1458, %v1621, %v1620
        %v1623 = vperm.slane %v1384, %v1460
        %v1624 = vsel %vm1462, %v1623, %v1622
        %v1625 = vperm.slane %v1385, %v1450
        %v1626 = vperm.slane %v1386, %v1452
        %v1627 = vsel %vm1454, %v1626, %v1625
        %v1628 = vperm.slane %v1387, %v1456
        %v1629 = vsel %vm1458, %v1628, %v1627
        %v1630 = vperm.slane %v1388, %v1460
        %v1631 = vsel %vm1462, %v1630, %v1629
        %v1632 = vperm.slane %v1389, %v1450
        %v1633 = vperm.slane %v1390, %v1452
        %v1634 = vsel %vm1454, %v1633, %v1632
        %v1635 = vperm.slane %v1391, %v1456
        %v1636 = vsel %vm1458, %v1635, %v1634
        %v1637 = vperm.slane %v1392, %v1460
        %v1638 = vsel %vm1462, %v1637, %v1636
        %v1639 = vperm.slane %v1393, %v1450
        %v1640 = vperm.slane %v1394, %v1452
        %v1641 = vsel %vm1454, %v1640, %v1639
        %v1642 = vperm.slane %v1395, %v1456
        %v1643 = vsel %vm1458, %v1642, %v1641
        %v1644 = vperm.slane %v1396, %v1460
        %v1645 = vsel %vm1462, %v1644, %v1643
        %v1646 = vperm.slane %v1397, %v1450
        %v1647 = vperm.slane %v1398, %v1452
        %v1648 = vsel %vm1454, %v1647, %v1646
        %v1649 = vperm.slane %v1399, %v1456
        %v1650 = vsel %vm1458, %v1649, %v1648
        %v1651 = vperm.slane %v1400, %v1460
        %v1652 = vsel %vm1462, %v1651, %v1650
        %v1653 = vperm.slane %v1401, %v1450
        %v1654 = vperm.slane %v1402, %v1452
        %v1655 = vsel %vm1454, %v1654, %v1653
        %v1656 = vperm.slane %v1403, %v1456
        %v1657 = vsel %vm1458, %v1656, %v1655
        %v1658 = vperm.slane %v1404, %v1460
        %v1659 = vsel %vm1462, %v1658, %v1657
        %v1660 = vperm.slane %v1405, %v1450
        %v1661 = vperm.slane %v1406, %v1452
        %v1662 = vsel %vm1454, %v1661, %v1660
        %v1663 = vperm.slane %v1407, %v1456
        %v1664 = vsel %vm1458, %v1663, %v1662
        %v1665 = vperm.slane %v1408, %v1460
        %v1666 = vsel %vm1462, %v1665, %v1664
        %v1667 = vperm.slane %v1409, %v1450
        %v1668 = vperm.slane %v1410, %v1452
        %v1669 = vsel %vm1454, %v1668, %v1667
        %v1670 = vperm.slane %v1411, %v1456
        %v1671 = vsel %vm1458, %v1670, %v1669
        %v1672 = vperm.slane %v1412, %v1460
        %v1673 = vsel %vm1462, %v1672, %v1671
        %v1674 = vperm.slane %v1413, %v1450
        %v1675 = vperm.slane %v1414, %v1452
        %v1676 = vsel %vm1454, %v1675, %v1674
        %v1677 = vperm.slane %v1415, %v1456
        %v1678 = vsel %vm1458, %v1677, %v1676
        %v1679 = vperm.slane %v1416, %v1460
        %v1680 = vsel %vm1462, %v1679, %v1678
        %v1681 = vperm.slane %v1417, %v1450
        %v1682 = vperm.slane %v1418, %v1452
        %v1683 = vsel %vm1454, %v1682, %v1681
        %v1684 = vperm.slane %v1419, %v1456
        %v1685 = vsel %vm1458, %v1684, %v1683
        %v1686 = vperm.slane %v1420, %v1460
        %v1687 = vsel %vm1462, %v1686, %v1685
        %v1688 = vperm.slane %v1421, %v1450
        %v1689 = vperm.slane %v1422, %v1452
        %v1690 = vsel %vm1454, %v1689, %v1688
        %v1691 = vperm.slane %v1423, %v1456
        %v1692 = vsel %vm1458, %v1691, %v1690
        %v1693 = vperm.slane %v1424, %v1460
        %v1694 = vsel %vm1462, %v1693, %v1692
        %v1695 = vperm.slane %v1425, %v1450
        %v1696 = vperm.slane %v1426, %v1452
        %v1697 = vsel %vm1454, %v1696, %v1695
        %v1698 = vperm.slane %v1427, %v1456
        %v1699 = vsel %vm1458, %v1698, %v1697
        %v1700 = vperm.slane %v1428, %v1460
        %v1701 = vsel %vm1462, %v1700, %v1699
        %v1702 = vperm.slane %v1429, %v1450
        %v1703 = vperm.slane %v1430, %v1452
        %v1704 = vsel %vm1454, %v1703, %v1702
        %v1705 = vperm.slane %v1431, %v1456
        %v1706 = vsel %vm1458, %v1705, %v1704
        %v1707 = vperm.slane %v1432, %v1460
        %v1708 = vsel %vm1462, %v1707, %v1706
        %v1709 = vperm.slane %v1433, %v1450
        %v1710 = vperm.slane %v1434, %v1452
        %v1711 = vsel %vm1454, %v1710, %v1709
        %v1712 = vperm.slane %v1435, %v1456
        %v1713 = vsel %vm1458, %v1712, %v1711
        %v1714 = vperm.slane %v1436, %v1460
        %v1715 = vsel %vm1462, %v1714, %v1713
        %v1716 = vperm.slane %v1437, %v1450
        %v1717 = vperm.slane %v1438, %v1452
        %v1718 = vsel %vm1454, %v1717, %v1716
        %v1719 = vperm.slane %v1439, %v1456
        %v1720 = vsel %vm1458, %v1719, %v1718
        %v1721 = vperm.slane %v1440, %v1460
        %v1722 = vsel %vm1462, %v1721, %v1720
        %v1723 = vperm.slane %v1441, %v1450
        %v1724 = vperm.slane %v1442, %v1452
        %v1725 = vsel %vm1454, %v1724, %v1723
        %v1726 = vperm.slane %v1443, %v1456
        %v1727 = vsel %vm1458, %v1726, %v1725
        %v1728 = vperm.slane %v1444, %v1460
        %v1729 = vsel %vm1462, %v1728, %v1727
        %v1730 = vperm.slane %v1445, %v1450
        %v1731 = vperm.slane %v1446, %v1452
        %v1732 = vsel %vm1454, %v1731, %v1730
        %v1733 = vperm.slane %v1447, %v1456
        %v1734 = vsel %vm1458, %v1733, %v1732
        %v1735 = vperm.slane %v1448, %v1460
        %v1736 = vsel %vm1462, %v1735, %v1734
        %vm1737 = vcmask 1041409
        %v1738 = vsel %vm1737, %v1470, %v1463
        %vm1739 = vcmask 1042434
        %v1740 = vsel %vm1739, %v1477, %v1738
        %vm1741 = vcmask 1043459
        %v1742 = vsel %vm1741, %v1484, %v1740
        %vm1743 = vcmask 1044484
        %v1744 = vsel %vm1743, %v1491, %v1742
        %vm1745 = vcmask 1045509
        %v1746 = vsel %vm1745, %v1498, %v1744
        %vm1747 = vcmask 1046534
        %v1748 = vsel %vm1747, %v1505, %v1746
        %vm1749 = vcmask 1047559
        %v1750 = vsel %vm1749, %v1512, %v1748
        %v1751 = vsel %vm1737, %v1526, %v1519
        %v1752 = vsel %vm1739, %v1533, %v1751
        %v1753 = vsel %vm1741, %v1540, %v1752
        %v1754 = vsel %vm1743, %v1547, %v1753
        %v1755 = vsel %vm1745, %v1554, %v1754
        %v1756 = vsel %vm1747, %v1561, %v1755
        %v1757 = vsel %vm1749, %v1568, %v1756
        %v1758 = vsel %vm1737, %v1582, %v1575
        %v1759 = vsel %vm1739, %v1589, %v1758
        %v1760 = vsel %vm1741, %v1596, %v1759
        %v1761 = vsel %vm1743, %v1603, %v1760
        %v1762 = vsel %vm1745, %v1610, %v1761
        %v1763 = vsel %vm1747, %v1617, %v1762
        %v1764 = vsel %vm1749, %v1624, %v1763
        %v1765 = vsel %vm1737, %v1638, %v1631
        %v1766 = vsel %vm1739, %v1645, %v1765
        %v1767 = vsel %vm1741, %v1652, %v1766
        %v1768 = vsel %vm1743, %v1659, %v1767
        %v1769 = vsel %vm1745, %v1666, %v1768
        %v1770 = vsel %vm1747, %v1673, %v1769
        %v1771 = vsel %vm1749, %v1680, %v1770
        %v1772 = vsel %vm1737, %v1694, %v1687
        %v1773 = vsel %vm1739, %v1701, %v1772
        %v1774 = vsel %vm1741, %v1708, %v1773
        %v1775 = vsel %vm1743, %v1715, %v1774
        %v1776 = vsel %vm1745, %v1722, %v1775
        %v1777 = vsel %vm1747, %v1729, %v1776
        %v1778 = vsel %vm1749, %v1736, %v1777
        %v1779 = vpack.c.b16 %v1757, %v1750
        %v1780 = vpack.c.b16 %v1771, %v1764
        %v1781 = vpack.c.b16 %v1778, %v1778
        %v1786 = vunpack.c.l.b16 %v1170
        %v1787 = vunpack.c.l.b16 %v1171
        %v1788 = vunpack.c.l.b16 %v1172
        %v1789 = vunpack.c.l.b16 %v1173
        %v1790 = vpack.c.b16 %v1787, %v1786
        %v1791 = vpack.c.b16 %v1789, %v1788
        %v1795 = vsel %vm1191, %v1779, 0
        %v1798 = vsel %vm1191, %v1780, 0
        %v1801 = vsel %vm1191, %v1781, 0
        %1803 = vmatpush.bf16.msra.mxu0 0
        %1804 = vmatpush.bf16.msra.mxu0 0
        %1805 = vmatpush.bf16.msra.mxu0 0
        %1806 = vmatpush.bf16.msra.mxu0 0
        %1807 = vmatpush.bf16.msra.mxu0 0
        %1808 = vmatpush.bf16.msra.mxu0 0
        %1809 = vmatpush.bf16.msra.mxu0 %v1791
        %1810 = vmatpush.bf16.msra.mxu0 %v1790
        %1811 = vmatmul.bf16.gmra.mxu0 %v1795
        %v1812 = vpop.f32.mrf.mxu0
        %v1813 = vadd.f32 %v1208, %v1812
        %v1814 = vpop.f32.mrf.mxu0
        %v1815 = vadd.f32 %v1208, %v1814
        %1816 = vmatmul.bf16.gmra.mxu0 %v1798
        %v1817 = vpop.f32.mrf.mxu0
        %v1818 = vadd.f32 %v1208, %v1817
        %v1819 = vpop.f32.mrf.mxu0
        %v1820 = vadd.f32 %v1208, %v1819
        %1821 = vmatmul.bf16.gmra.mxu0 %v1801
        %v1822 = vpop.f32.mrf.mxu0
        %v1823 = vadd.f32 %v1208, %v1822
        %v1824 = vpop.f32.mrf.mxu0
        %1825 = vdwg.mxu0
        %v1826 = vld [vmem:[%s5] sm:$0x1]
        %v1828 = vperm.slane %v1826, 0
        %v1830 = vadd.f32 %v1813, %v1828
        %v1831 = vadd.f32 %v1815, %v1828
        %v1832 = vadd.f32 %v1818, %v1828
        %v1833 = vadd.f32 %v1820, %v1828
        %v1834 = vadd.f32 %v1823, %v1828
        %v1835 = vtanh.pop %v1830
        %v1836 = vtanh.pop %v1831
        %v1837 = vtanh.pop %v1832
        %v1838 = vtanh.pop %v1833
        %v1839 = vtanh.pop %v1834
        %v1840 = vpack.c.bf16 %v1836, %v1835
        %v1841 = vpack.c.bf16 %v1838, %v1837
        %v1842 = vpack.c.bf16 %v1839, %v1839
        %v1843 = vld [vmem:[%s6] sm:$0xf]
        %v1844 = vld [vmem:[%s6 + $0x4] sm:$0xf]
        %v1845 = vld [vmem:[%s6 + $0x8] sm:$0xf]
        %v1846 = vld [vmem:[%s6 + $0xc] sm:$0xf]
        %v1847 = vld [vmem:[%s7] sm:$0x1]
        %v1849 = vperm.slane %v1847, 0
        %v1855 = vunpack.c.l.b16 %v1843
        %v1856 = vunpack.c.l.b16 %v1844
        %v1857 = vunpack.c.l.b16 %v1845
        %v1858 = vunpack.c.l.b16 %v1846
        %v1859 = vpack.c.b16 %v1856, %v1855
        %v1860 = vpack.c.b16 %v1858, %v1857
        %v1864 = vsel %vm1191, %v1840, 0
        %v1867 = vsel %vm1191, %v1841, 0
        %v1870 = vsel %vm1191, %v1842, 0
        %1872 = vmatpush.bf16.msra.mxu0 0
        %1873 = vmatpush.bf16.msra.mxu0 0
        %1874 = vmatpush.bf16.msra.mxu0 0
        %1875 = vmatpush.bf16.msra.mxu0 0
        %1876 = vmatpush.bf16.msra.mxu0 0
        %1877 = vmatpush.bf16.msra.mxu0 0
        %1878 = vmatpush.bf16.msra.mxu0 %v1860
        %1879 = vmatpush.bf16.msra.mxu0 %v1859
        %1880 = vmatmul.bf16.gmra.mxu0 %v1864
        %v1881 = vpop.f32.mrf.mxu0
        %v1882 = vadd.f32 %v1849, %v1881
        %v1883 = vpop.f32.mrf.mxu0
        %v1884 = vadd.f32 %v1849, %v1883
        %1885 = vmatmul.bf16.gmra.mxu0 %v1867
        %v1886 = vpop.f32.mrf.mxu0
        %v1887 = vadd.f32 %v1849, %v1886
        %v1888 = vpop.f32.mrf.mxu0
        %v1889 = vadd.f32 %v1849, %v1888
        %1890 = vmatmul.bf16.gmra.mxu0 %v1870
        %v1891 = vpop.f32.mrf.mxu0
        %v1892 = vadd.f32 %v1849, %v1891
        %v1893 = vpop.f32.mrf.mxu0
        %1894 = vdwg.mxu0
        %1895 = vst [vmem:[%s309] sm:$0xff] %v1882
        %1896 = vst [vmem:[%s309 + $0x8] sm:$0xff] %v1884
        %1897 = vst [vmem:[%s309 + $0x10] sm:$0xff] %v1887
        %1898 = vst [vmem:[%s309 + $0x18] sm:$0xff] %v1889
        %1899 = vst [vmem:[%s309 + $0x20] sm:$0xff] %v1892
        %s1900 = sand.u32 %s208, 1
        %s1901 = scalar_lea.sflag [#allocation3], %s1900
        %s1902 = sand.u32 %s208, 1
        %s1903 = smul.addr %s1902, 40
        %s1904 = scalar_lea.vmem [#allocation2], %s1903
        // Predicated region
        $region53: #{tpu_custom_call.1} parent=51 // pred_check
          %p1905 = pneg %p218
        $region54: #{tpu_custom_call.1} parent=51 // pred_check_branch
          %1907 = sbr.rel (%p1905) target = $region56
        $region55: #{tpu_custom_call.1} parent=51 // pred_region
          %1909 = vsyncadd %s1901, 0
          %s1910 = smul.addr %s22, 5
          %s1911 = smul.addr %s1910, 8
          %s1912 = scalar_lea.hbm %s8, %s1911
          %s1913 = sshll.u32 %s1904, 4
          %s1914 = int_to_ptr.vmem [resolvable:$true] %s1913
          %s1915 = sshll.u32 %s1912, 4
          %s1916 = int_to_ptr.hbm [resolvable:$true] %s1915
          %1921 = dma.vmem_to_hbm [thread:$0]  %s1914, 640, %s1916, %s1901, 128, 128, 8
        $region56: #{tpu_custom_call.1} parent=51 // pred_fallthru
          _
      $region52: #{tpu_custom_call.1} parent=5 // pred_fallthru
        _
      %p1922 = scmp.le.s32.totalorder 2, %s17
      // Predicated region
      $region57: #{tpu_custom_call.1} parent=5 // pred_check
        %p1923 = pneg %p1922
      $region58: #{tpu_custom_call.1} parent=5 // pred_check_branch
        %1925 = sbr.rel (%p1923) target = $region60
      $region59: #{tpu_custom_call.1} parent=5 // pred_region
        %s1926 = ssub.s32 %s17, 2
        // Predicated region
        $region61: #{tpu_custom_call.1} parent=59 // pred_check
          %p1927 = pneg %p224
        $region62: #{tpu_custom_call.1} parent=59 // pred_check_branch
          %1929 = sbr.rel (%p1927) target = $region64
        $region63: #{tpu_custom_call.1} parent=59 // pred_region
          %s1930 = sand.u32 %s209, 1
          %s1931 = scalar_lea.sflag [#allocation3], %s1930
          %s1932 = sand.u32 %s209, 1
          %s1933 = smul.addr %s1932, 40
          %s1934 = scalar_lea.vmem [#allocation2], %s1933
          %1936 = dma.done %s1931, 640
        $region64: #{tpu_custom_call.1} parent=59 // pred_fallthru
          _
      $region60: #{tpu_custom_call.1} parent=5 // pred_fallthru
        _
    $region6: #{tpu_custom_call.1} parent=1 // loop_footer
      %s21 = sadd.s32 1, %s17
    $region7: #{tpu_custom_call.1} parent=1 // loop_footer_branch
      %16 = sbr.rel target = $region3
    $region8: #{tpu_custom_call.1} parent=1 // loop_exit
      _
    %1937 = vsyncpa [#allocation3], 1
    %s1938 = scalar_lea.sflag [#allocation3], 1
    %1939 = vsyncpa %s1938, 1

</llo_original>
